<compile_context>
chip_gen: v5e
topology: v5e:2x2
jax: 0.10.0
libtpu: 0.0.40
codegen_flags: <defaults>
</compile_context>

<pallas_src>
import functools

import jax
import jax.numpy as jnp
from jax.experimental import pallas as pl
from jax.experimental.pallas import tpu as pltpu

DPAD = 128                        # lane-dense padded feature width (in/out dims <= 128)
_VMEM_BUDGET = 40 * 1024 * 1024   # conservative plan budget (fits v7x's 64 MiB VMEM)


# --------------------------------------------------------------------------- #
# Fused kernel: grid = (layer, row-tile, k-tile), k innermost (reduction).
# --------------------------------------------------------------------------- #
def _gcn_kernel(a_ref, h0_ref, d_ref, w_ref, b_ref, o_ref, hbuf, acc_ref, *rest,
                tm, tk, num_layers, last_activate, a_resident):
    abuf = rest[0] if a_resident else None

    l = pl.program_id(0)           # layer            (slowest)
    i = pl.program_id(1)           # output row tile
    k = pl.program_id(2)           # reduction tile   (innermost)
    nk = pl.num_programs(2)

    # One-time prime at the very first grid step: H0 (already D^-1/2-scaled,
    # padded, bf16) into ping/pong slot 0, and optionally A into resident VMEM.
    @pl.when((l == 0) & (i == 0) & (k == 0))
    def _prime():
        pltpu.sync_copy(h0_ref, hbuf.at[0])
        if a_resident:
            pltpu.sync_copy(a_ref, abuf)

    src = l % 2                                    # slot holding D^-1/2 * H_prev
    row_k = pl.multiple_of(k * tk, tk)
    h_k = hbuf[src, pl.ds(row_k, tk), :]           # (tk, DPAD) bf16

    if a_resident:
        a_tile = abuf[i, k].astype(jnp.bfloat16)   # exact 0/1 values
    else:
        a_tile = a_ref[...].astype(jnp.bfloat16)   # streamed (tm, tk) int8 tile

    part = jnp.dot(a_tile, h_k, preferred_element_type=jnp.float32)

    @pl.when(k == 0)
    def _first():
        acc_ref[...] = part                        # direct assign, no zero-fill

    @pl.when(k > 0)
    def _accum():
        acc_ref[...] += part

    # Epilogue (once per layer x row tile): re-apply D^-1/2, transform, bias,
    # leaky_relu; write the output block and (if not last layer) the next
    # layer's pre-scaled features into the other ping/pong slot.
    @pl.when(k == nk - 1)
    def _epilogue():
        d_i = d_ref[...]                                      # (tm, 1) f32
        agg = acc_ref[...] * d_i                              # rows of A_hat @ H_prev
        z = jnp.dot(agg, w_ref[0],
                    preferred_element_type=jnp.float32) + b_ref[0]
        activate = jnp.logical_or(l + 1 < num_layers, last_activate)
        slope = jnp.where(activate, jnp.float32(0.01), jnp.float32(1.0))
        out = jnp.where(z >= 0, z, slope * z)                 # leaky_relu / identity
        o_ref[...] = out.astype(o_ref.dtype)

        @pl.when(l + 1 < num_layers)                          # skip dead store on last layer
        def _store_next():
            row_i = pl.multiple_of(i * tm, tm)
            hbuf[1 - src, pl.ds(row_i, tm), :] = (out * d_i).astype(jnp.bfloat16)


# --------------------------------------------------------------------------- #
# Host-side planning.
# --------------------------------------------------------------------------- #
def _round_up(x, m):
    return (x + m - 1) // m * m


def _vmem_plan_bytes(n_pad, tm, tk, a_resident):
    hbuf = 2 * n_pad * DPAD * 2            # ping/pong H (bf16)
    acc = tm * DPAD * 4                    # f32 accumulator
    wbuf = 2 * DPAD * DPAD * 4             # double-buffered W (f32)
    bbuf = 2 * 8 * DPAD * 4                # bias, sublane padded
    dbuf = 2 * tm * DPAD * 4               # D^-1/2 column, lane padded
    obuf = 2 * tm * DPAD * 2               # double-buffered bf16 output block
    abuf = n_pad * n_pad if a_resident else 2 * tm * tk   # int8
    return hbuf + acc + wbuf + bbuf + dbuf + obuf + abuf


def _choose_plan(n_pad, force_stream=False):
    tm = 256 if n_pad % 256 == 0 else 128
    if not force_stream:
        for tk in (512, 256, 128):         # A resident: moderate tk is enough
            if n_pad % tk == 0 and _vmem_plan_bytes(n_pad, tm, tk, True) <= _VMEM_BUDGET:
                return tm, tk, True
    for tk in (2048, 1024, 512, 256, 128):  # streaming: large reduction tiles
        if n_pad % tk == 0 and _vmem_plan_bytes(n_pad, tm, tk, False) <= _VMEM_BUDGET:
            return tm, tk, False
    # TODO(synk): for graphs whose resident inter-layer H alone exceeds VMEM,
    # spill H to HBM with manual make_async_copy between layers.
    return tm, 128, False


def gcn_forward_fused(adj_bin, n_feat, w_stack_f32, b_stack_f32, *,
                      num_layers, last_activate, out_dim, force_stream=False):
    n = adj_bin.shape[0]
    din = n_feat.shape[1]
    assert din <= DPAD and out_dim <= DPAD
    n_pad = _round_up(n, DPAD)
    tm, tk, a_resident = _choose_plan(n_pad, force_stream)
    ni, nk = n_pad // tm, n_pad // tk

    # Folded normalization: A is binary (self-loops included); D^-1/2 is applied
    # to H rows here and to the aggregated rows inside the kernel epilogue.
    deg = jnp.sum(adj_bin.astype(jnp.float32), axis=1)
    d = jnp.where(deg > 0, jax.lax.rsqrt(deg), 0.0)

    a_i8 = jnp.zeros((n_pad, n_pad), jnp.int8).at[:n, :n].set(adj_bin.astype(jnp.int8))
    if a_resident:
        # Pre-tile so the kernel slices tiles with leading-dim indices only.
        a_in = a_i8.reshape(ni, tm, nk, tk).transpose(0, 2, 1, 3)
        a_spec = pl.BlockSpec(memory_space=pl.ANY)
    else:
        a_in = a_i8
        a_spec = pl.BlockSpec((tm, tk), lambda l, i, k: (i, k))

    h0 = jnp.zeros((n_pad, DPAD), jnp.bfloat16).at[:n, :din].set(
        (n_feat.astype(jnp.float32) * d[:, None]).astype(jnp.bfloat16))
    d_pad = jnp.zeros((n_pad, 1), jnp.float32).at[:n, 0].set(d)

    kernel = functools.partial(_gcn_kernel, tm=tm, tk=tk, num_layers=num_layers,
                               last_activate=bool(last_activate),
                               a_resident=a_resident)

    scratch = [pltpu.VMEM((2, n_pad, DPAD), jnp.bfloat16),   # ping/pong H
               pltpu.VMEM((tm, DPAD), jnp.float32)]          # aggregation accumulator
    if a_resident:
        scratch.append(pltpu.VMEM((ni, nk, tm, tk), jnp.int8))

    vmem_limit = int(max(_vmem_plan_bytes(n_pad, tm, tk, a_resident) + (8 << 20),
                         32 << 20))

    out = pl.pallas_call(
        kernel,
        out_shape=jax.ShapeDtypeStruct((n_pad, DPAD), jnp.bfloat16),
        grid_spec=pltpu.PrefetchScalarGridSpec(
            num_scalar_prefetch=0,
            grid=(num_layers, ni, nk),
            in_specs=[
                a_spec,                                            # adjacency (int8)
                pl.BlockSpec(memory_space=pl.ANY),                 # H0, raw HBM ref
                pl.BlockSpec((tm, 1), lambda l, i, k: (i, 0)),     # D^-1/2 row scale
                pl.BlockSpec((1, DPAD, DPAD), lambda l, i, k: (l, 0, 0)),  # W_l (f32)
                pl.BlockSpec((1, 1, DPAD), lambda l, i, k: (l, 0, 0)),     # b_l (f32)
            ],
            out_specs=pl.BlockSpec((tm, DPAD), lambda l, i, k: (i, 0)),
            scratch_shapes=scratch),
        compiler_params=pltpu.CompilerParams(
            # Layer axis carries a dependency through the VMEM scratch and the
            # k axis accumulates -> everything stays sequential on one core.
            # TODO(synk): on v7x, split row tiles across the 2 TensorCores with
            # pl.core_map + VMEM_SHARED exchange of the per-layer H.
            dimension_semantics=("arbitrary", "arbitrary", "arbitrary"),
            vmem_limit_bytes=vmem_limit),
    )(a_in, h0, d_pad, w_stack_f32, b_stack_f32)

    return out[:n, :out_dim].astype(jnp.float32)


# --------------------------------------------------------------------------- #
# Module wrapper (mirrors the PyTorch UnsupervisedGCN forward semantics).
# --------------------------------------------------------------------------- #
class UnsupervisedGCN:
    def __init__(self, node_input_dim, node_hidden_dim, edge_input_dim,
                 num_layers, num_heads=8, last_activate=False, *, key):
        assert node_hidden_dim % num_heads == 0
        assert node_input_dim <= DPAD and node_hidden_dim <= DPAD
        self.hid_dim = node_hidden_dim
        self.num_layers = num_layers
        self.last_activate = last_activate
        ws, bs = [], []
        for i in range(num_layers):
            in_f = node_input_dim if i == 0 else node_hidden_dim
            out_f = node_hidden_dim
            key, wk = jax.random.split(key)
            limit = (6.0 / (in_f + out_f)) ** 0.5   # Xavier uniform (DGL default), zero bias
            w = jax.random.uniform(wk, (in_f, out_f), jnp.float32, -limit, limit)
            ws.append(jnp.zeros((DPAD, DPAD), jnp.float32).at[:in_f, :out_f].set(w))
            bs.append(jnp.zeros((DPAD,), jnp.float32))
        self.w_stack = jnp.stack(ws)                                  # (L, DPAD, DPAD) f32
        self.b_stack = jnp.stack(bs).reshape(num_layers, 1, DPAD)     # (L, 1, DPAD) f32
        self._fwd = jax.jit(functools.partial(
            gcn_forward_fused, num_layers=num_layers,
            last_activate=bool(last_activate), out_dim=node_hidden_dim))

    def __call__(self, adj_bin, n_feat, e_feat=None):
        # TODO(synk): e_feat / edge_input_dim are unused by GraphConv, matching the
        # reference forward; the DGL graph is represented by its dense 0/1
        # adjacency (self-loops included).
        h = self._fwd(adj_bin, n_feat, self.w_stack, self.b_stack)
        return h.reshape(-1, self.hid_dim)

    def reference_forward(self, adj_bin, n_feat):
        """Pure-JAX f32 reference: h <- act(D^-1/2 A D^-1/2 h W + b)."""
        n, din = n_feat.shape
        deg = adj_bin.astype(jnp.float32).sum(axis=1)
        d = jnp.where(deg > 0, 1.0 / jnp.sqrt(deg), 0.0)
        a_hat = adj_bin.astype(jnp.float32) * d[:, None] * d[None, :]
        h = jnp.zeros((n, DPAD), jnp.float32).at[:, :din].set(n_feat)
        for l in range(self.num_layers):
            h = (a_hat @ h) @ self.w_stack[l] + self.b_stack[l]
            if l + 1 < self.num_layers or self.last_activate:
                h = jnp.where(h >= 0, h, 0.01 * h)
        return h[:, :self.hid_dim]


def build_binary_adjacency(key, num_nodes, p_edge=0.2):
    """Dense symmetric random 0/1 graph with self-loops (float32)."""
    m = jax.random.uniform(key, (num_nodes, num_nodes)) < p_edge
    a = jnp.logical_or(m, m.T).astype(jnp.float32)
    return jnp.minimum(a + jnp.eye(num_nodes, dtype=jnp.float32), 1.0)


if __name__ == "__main__":
    key = jax.random.PRNGKey(0)
    k_graph, k_feat, k_model = jax.random.split(key, 3)

    num_nodes = 256
    node_input_dim = 16
    node_hidden_dim = 32
    num_layers = 2

    adj = build_binary_adjacency(k_graph, num_nodes)
    n_feat = jax.random.normal(k_feat, (num_nodes, node_input_dim), jnp.float32)

    model = UnsupervisedGCN(node_input_dim, node_hidden_dim, edge_input_dim=0,
                            num_layers=num_layers, num_heads=8,
                            last_activate=False, key=k_model)

    out = jax.block_until_ready(model(adj, n_feat))
    assert out.shape == (num_nodes, node_hidden_dim)

    ref = model.reference_forward(adj, n_feat)
    err = float(jnp.max(jnp.abs(out - ref)))
    assert jnp.allclose(out, ref, rtol=5e-2, atol=5e-2), f"resident path max err {err}"

    # Also exercise the streaming-A fallback path on the same inputs.
    out_s = jax.block_until_ready(
        gcn_forward_fused(adj, n_feat, model.w_stack, model.b_stack,
                          num_layers=num_layers, last_activate=False,
                          out_dim=node_hidden_dim, force_stream=True))
    err_s = float(jnp.max(jnp.abs(out_s - ref)))
    assert jnp.allclose(out_s, ref, rtol=5e-2, atol=5e-2), f"streaming path max err {err_s}"

    print("KERNEL_OK")
</pallas_src>

<mosaic_0001>
module attributes {stable_mosaic.version = 11 : i64} {
  func.func @_gcn_kernel(%arg0: i32, %arg1: i32, %arg2: i32, %arg3: memref<1x1x256x256xi8, #tpu.memory_space<any>>, %arg4: memref<256x128xbf16, #tpu.memory_space<any>>, %arg5: memref<256x1xf32, #tpu.memory_space<vmem>>, %arg6: memref<1x128x128xf32, #tpu.memory_space<vmem>>, %arg7: memref<1x1x128xf32, #tpu.memory_space<vmem>>, %arg8: memref<256x128xbf16, #tpu.memory_space<vmem>>, %arg9: memref<2x256x128xbf16, #tpu.memory_space<vmem>>, %arg10: memref<256x128xf32, #tpu.memory_space<vmem>>, %arg11: memref<1x1x256x256xi8, #tpu.memory_space<vmem>>) attributes {dimension_semantics = [#tpu.dimension_semantics<arbitrary>, #tpu.dimension_semantics<arbitrary>, #tpu.dimension_semantics<arbitrary>], iteration_bounds = array<i64: 2, 1, 1>, scalar_prefetch = 0 : i64, scratch_operands = 3 : i64, tpu.core_type = #tpu.core_type<tc>, window_params = [{}, {}, {transform_indices = @transform_2, window_bounds = array<i64: 256, 1>}, {transform_indices = @transform_3, window_bounds = array<i64: 1, 128, 128>}, {transform_indices = @transform_4, window_bounds = array<i64: 1, 1, 128>}, {transform_indices = @transform_5, window_bounds = array<i64: 256, 128>}]} {
    %c0_i32 = arith.constant 0 : i32
    %0 = arith.cmpi eq, %arg0, %c0_i32 : i32
    %c0_i32_0 = arith.constant 0 : i32
    %1 = arith.cmpi eq, %arg1, %c0_i32_0 : i32
    %2 = arith.andi %0, %1 : i1
    %c0_i32_1 = arith.constant 0 : i32
    %3 = arith.cmpi eq, %arg2, %c0_i32_1 : i32
    %4 = arith.andi %2, %3 : i1
    %5 = arith.extui %4 : i1 to i32
    %c0_i32_2 = arith.constant 0 : i32
    %6 = arith.cmpi ne, %5, %c0_i32_2 : i32
    scf.if %6 {
      %c0_i32_15 = arith.constant 0 : i32
      "tpu.region"() ({
        %38 = tpu.sem_alloc : memref<!tpu.dma_semaphore, #tpu.memory_space<semaphore_mem>>
        %c0_i32_16 = arith.constant 0 : i32
        %c0_i32_17 = arith.constant 0 : i32
        %39 = tpu.memref_slice %arg9[%c0_i32_15, %c0_i32_16, %c0_i32_17] : memref<2x256x128xbf16, #tpu.memory_space<vmem>> -> memref<1x256x128xbf16, #tpu.memory_space<vmem>>
        %40 = tpu.memref_squeeze %39 : memref<1x256x128xbf16, #tpu.memory_space<vmem>> -> memref<256x128xbf16, #tpu.memory_space<vmem>>
        tpu.enqueue_dma source(%arg4 : memref<256x128xbf16, #tpu.memory_space<any>>) target(%40 : memref<256x128xbf16, #tpu.memory_space<vmem>>) target_semaphore(%38 : memref<!tpu.dma_semaphore, #tpu.memory_space<semaphore_mem>>)
        %c0_i32_18 = arith.constant 0 : i32
        %c0_i32_19 = arith.constant 0 : i32
        %41 = tpu.memref_slice %arg9[%c0_i32_15, %c0_i32_18, %c0_i32_19] : memref<2x256x128xbf16, #tpu.memory_space<vmem>> -> memref<1x256x128xbf16, #tpu.memory_space<vmem>>
        %42 = tpu.memref_squeeze %41 : memref<1x256x128xbf16, #tpu.memory_space<vmem>> -> memref<256x128xbf16, #tpu.memory_space<vmem>>
        tpu.wait_dma2 semaphore(%38 : memref<!tpu.dma_semaphore, #tpu.memory_space<semaphore_mem>>) src(%arg4 : memref<256x128xbf16, #tpu.memory_space<any>>) dst(%42 : memref<256x128xbf16, #tpu.memory_space<vmem>>)
        tpu.yield
      }) : () -> ()
      "tpu.region"() ({
        %38 = tpu.sem_alloc : memref<!tpu.dma_semaphore, #tpu.memory_space<semaphore_mem>>
        tpu.enqueue_dma source(%arg3 : memref<1x1x256x256xi8, #tpu.memory_space<any>>) target(%arg11 : memref<1x1x256x256xi8, #tpu.memory_space<vmem>>) target_semaphore(%38 : memref<!tpu.dma_semaphore, #tpu.memory_space<semaphore_mem>>)
        tpu.wait_dma2 semaphore(%38 : memref<!tpu.dma_semaphore, #tpu.memory_space<semaphore_mem>>) src(%arg3 : memref<1x1x256x256xi8, #tpu.memory_space<any>>) dst(%arg11 : memref<1x1x256x256xi8, #tpu.memory_space<vmem>>)
        tpu.yield
      }) : () -> ()
    } else {
    }
    %c2_i32 = arith.constant 2 : i32
    %c0_i32_3 = arith.constant 0 : i32
    %7 = arith.cmpi eq, %c2_i32, %c0_i32_3 : i32
    %c1_i32 = arith.constant 1 : i32
    %8 = arith.select %7, %c1_i32, %c2_i32 : i32
    %9 = arith.remsi %arg0, %8 : i32
    %c0_i32_4 = arith.constant 0 : i32
    %10 = arith.cmpi ne, %9, %c0_i32_4 : i32
    %c0_i32_5 = arith.constant 0 : i32
    %11 = arith.cmpi slt, %9, %c0_i32_5 : i32
    %c0_i32_6 = arith.constant 0 : i32
    %12 = arith.cmpi slt, %8, %c0_i32_6 : i32
    %13 = arith.xori %11, %12 : i1
    %14 = arith.andi %13, %10 : i1
    %15 = arith.addi %9, %8 : i32
    %16 = arith.select %14, %15, %9 : i32
    %c256_i32 = arith.constant 256 : i32
    %17 = arith.muli %arg2, %c256_i32 : i32
    %18 = tpu.assume_multiple %17, 256 : i32
    %19 = arith.index_cast %16 : i32 to index
    %20 = arith.index_cast %18 : i32 to index
    %c0 = arith.constant 0 : index
    %21 = vector.load %arg9[%19, %20, %c0] : memref<2x256x128xbf16, #tpu.memory_space<vmem>>, vector<1x256x128xbf16>
    %22 = vector.shape_cast %21 : vector<1x256x128xbf16> to vector<256x128xbf16>
    %23 = arith.index_cast %arg1 : i32 to index
    %24 = arith.index_cast %arg2 : i32 to index
    %c0_7 = arith.constant 0 : index
    %c0_8 = arith.constant 0 : index
    %25 = vector.load %arg11[%23, %24, %c0_7, %c0_8] : memref<1x1x256x256xi8, #tpu.memory_space<vmem>>, vector<1x1x256x256xi8>
    %26 = vector.shape_cast %25 : vector<1x1x256x256xi8> to vector<256x256xi8>
    %27 = arith.sitofp %26 : vector<256x256xi8> to vector<256x256xbf16>
    %cst = arith.constant dense<0.000000e+00> : vector<256x128xf32>
    %28 = tpu.matmul %27, %22, %cst {dimension_numbers = #tpu.dot_dimension_numbers<[1], [0], [0], [1], [0, 0, 1, 1], [], []>} : vector<256x256xbf16>, vector<256x128xbf16>, vector<256x128xf32> -> vector<256x128xf32>
    %c0_i32_9 = arith.constant 0 : i32
    %29 = arith.cmpi eq, %arg2, %c0_i32_9 : i32
    %30 = arith.extui %29 : i1 to i32
    %c0_i32_10 = arith.constant 0 : i32
    %31 = arith.cmpi ne, %30, %c0_i32_10 : i32
    scf.if %31 {
      %c0_15 = arith.constant 0 : index
      %c0_16 = arith.constant 0 : index
      %38 = vector.load %arg10[%c0_15, %c0_16] : memref<256x128xf32, #tpu.memory_space<vmem>>, vector<256x128xf32>
      tpu.vector_store %arg10[%c0_15, %c0_16], %28 {strides = array<i32>} : memref<256x128xf32, #tpu.memory_space<vmem>>, vector<256x128xf32>,
    } else {
    }
    %c0_i32_11 = arith.constant 0 : i32
    %32 = arith.cmpi sgt, %arg2, %c0_i32_11 : i32
    %33 = arith.extui %32 : i1 to i32
    %c0_i32_12 = arith.constant 0 : i32
    %34 = arith.cmpi ne, %33, %c0_i32_12 : i32
    scf.if %34 {
      %c0_15 = arith.constant 0 : index
      %c0_16 = arith.constant 0 : index
      %38 = vector.load %arg10[%c0_15, %c0_16] : memref<256x128xf32, #tpu.memory_space<vmem>>, vector<256x128xf32>
      %39 = arith.addf %38, %28 : vector<256x128xf32>
      %c0_17 = arith.constant 0 : index
      %c0_18 = arith.constant 0 : index
      %40 = vector.load %arg10[%c0_17, %c0_18] : memref<256x128xf32, #tpu.memory_space<vmem>>, vector<256x128xf32>
      tpu.vector_store %arg10[%c0_17, %c0_18], %39 {strides = array<i32>} : memref<256x128xf32, #tpu.memory_space<vmem>>, vector<256x128xf32>,
    } else {
    }
    %c0_i32_13 = arith.constant 0 : i32
    %35 = arith.cmpi eq, %arg2, %c0_i32_13 : i32
    %36 = arith.extui %35 : i1 to i32
    %c0_i32_14 = arith.constant 0 : i32
    %37 = arith.cmpi ne, %36, %c0_i32_14 : i32
    scf.if %37 {
      %c0_15 = arith.constant 0 : index
      %c0_16 = arith.constant 0 : index
      %38 = vector.load %arg5[%c0_15, %c0_16] : memref<256x1xf32, #tpu.memory_space<vmem>>, vector<256x1xf32>
      %c0_17 = arith.constant 0 : index
      %c0_18 = arith.constant 0 : index
      %39 = vector.load %arg10[%c0_17, %c0_18] : memref<256x128xf32, #tpu.memory_space<vmem>>, vector<256x128xf32>
      %40 = vector.broadcast %38 : vector<256x1xf32> to vector<256x128xf32>
      %41 = arith.mulf %39, %40 : vector<256x128xf32>
      %c0_19 = arith.constant 0 : index
      %c0_20 = arith.constant 0 : index
      %c0_21 = arith.constant 0 : index
      %42 = vector.load %arg6[%c0_19, %c0_20, %c0_21] : memref<1x128x128xf32, #tpu.memory_space<vmem>>, vector<1x128x128xf32>
      %43 = vector.shape_cast %42 : vector<1x128x128xf32> to vector<128x128xf32>
      %cst_22 = arith.constant dense<0.000000e+00> : vector<256x128xf32>
      %44 = tpu.matmul %41, %43, %cst_22 {dimension_numbers = #tpu.dot_dimension_numbers<[1], [0], [0], [1], [0, 0, 1, 1], [], []>} : vector<256x128xf32>, vector<128x128xf32>, vector<256x128xf32> -> vector<256x128xf32>
      %c0_23 = arith.constant 0 : index
      %c0_24 = arith.constant 0 : index
      %c0_25 = arith.constant 0 : index
      %45 = vector.load %arg7[%c0_23, %c0_24, %c0_25] : memref<1x1x128xf32, #tpu.memory_space<vmem>>, vector<1x1x128xf32>
      %46 = vector.shape_cast %45 : vector<1x1x128xf32> to vector<1x128xf32>
      %47 = vector.broadcast %46 : vector<1x128xf32> to vector<256x128xf32>
      %48 = arith.addf %44, %47 : vector<256x128xf32>
      %c1_i32_26 = arith.constant 1 : i32
      %49 = arith.addi %arg0, %c1_i32_26 : i32
      %c2_i32_27 = arith.constant 2 : i32
      %50 = arith.cmpi slt, %49, %c2_i32_27 : i32
      %false = arith.constant false
      %51 = arith.ori %50, %false : i1
      %cst_28 = arith.constant 0.00999999977 : f32
      %cst_29 = arith.constant 1.000000e+00 : f32
      %52 = arith.select %51, %cst_28, %cst_29 : f32
      %cst_30 = arith.constant 0.000000e+00 : f32
      %53 = vector.broadcast %cst_30 : f32 to vector<256x128xf32>
      %54 = arith.cmpf oge, %48, %53 : vector<256x128xf32>
      %55 = vector.broadcast %52 : f32 to vector<256x128xf32>
      %56 = arith.mulf %55, %48 : vector<256x128xf32>
      %57 = arith.select %54, %48, %56 : vector<256x128xi1>, vector<256x128xf32>
      %58 = arith.truncf %57 : vector<256x128xf32> to vector<256x128xbf16>
      %c0_31 = arith.constant 0 : index
      %c0_32 = arith.constant 0 : index
      %59 = vector.load %arg8[%c0_31, %c0_32] : memref<256x128xbf16, #tpu.memory_space<vmem>>, vector<256x128xbf16>
      tpu.vector_store %arg8[%c0_31, %c0_32], %58 {strides = array<i32>} : memref<256x128xbf16, #tpu.memory_space<vmem>>, vector<256x128xbf16>,
      %c1_i32_33 = arith.constant 1 : i32
      %60 = arith.addi %arg0, %c1_i32_33 : i32
      %c2_i32_34 = arith.constant 2 : i32
      %61 = arith.cmpi slt, %60, %c2_i32_34 : i32
      %62 = arith.extui %61 : i1 to i32
      %c0_i32_35 = arith.constant 0 : i32
      %63 = arith.cmpi ne, %62, %c0_i32_35 : i32
      scf.if %63 {
        %c256_i32_36 = arith.constant 256 : i32
        %64 = arith.muli %arg1, %c256_i32_36 : i32
        %65 = tpu.assume_multiple %64, 256 : i32
        %66 = vector.broadcast %38 : vector<256x1xf32> to vector<256x128xf32>
        %67 = arith.mulf %57, %66 : vector<256x128xf32>
        %68 = arith.truncf %67 : vector<256x128xf32> to vector<256x128xbf16>
        %c1_i32_37 = arith.constant 1 : i32
        %69 = arith.subi %c1_i32_37, %16 : i32
        %70 = arith.index_cast %69 : i32 to index
        %71 = arith.index_cast %65 : i32 to index
        %c0_38 = arith.constant 0 : index
        %72 = vector.load %arg9[%70, %71, %c0_38] : memref<2x256x128xbf16, #tpu.memory_space<vmem>>, vector<1x256x128xbf16>
        %73 = vector.shape_cast %72 : vector<1x256x128xbf16> to vector<256x128xbf16>
        %74 = vector.shape_cast %68 : vector<256x128xbf16> to vector<1x256x128xbf16>
        tpu.vector_store %arg9[%70, %71, %c0_38], %74 {strides = array<i32>} : memref<2x256x128xbf16, #tpu.memory_space<vmem>>, vector<1x256x128xbf16>,
      } else {
      }
    } else {
    }
    return
  }
  func.func @transform_2(%arg0: i32, %arg1: i32, %arg2: i32) -> (i32, i32) {
    %c0_i32 = arith.constant 0 : i32
    %c0_i32_0 = arith.constant 0 : i32
    return %arg1, %c0_i32 : i32, i32
  }
  func.func @transform_3(%arg0: i32, %arg1: i32, %arg2: i32) -> (i32, i32, i32) {
    %c0_i32 = arith.constant 0 : i32
    %c0_i32_0 = arith.constant 0 : i32
    %c0_i32_1 = arith.constant 0 : i32
    return %arg0, %c0_i32, %c0_i32_0 : i32, i32, i32
  }
  func.func @transform_4(%arg0: i32, %arg1: i32, %arg2: i32) -> (i32, i32, i32) {
    %c0_i32 = arith.constant 0 : i32
    %c0_i32_0 = arith.constant 0 : i32
    %c0_i32_1 = arith.constant 0 : i32
    return %arg0, %c0_i32, %c0_i32_0 : i32, i32, i32
  }
  func.func @transform_5(%arg0: i32, %arg1: i32, %arg2: i32) -> (i32, i32) {
    %c0_i32 = arith.constant 0 : i32
    %c0_i32_0 = arith.constant 0 : i32
    return %arg1, %c0_i32 : i32, i32
  }
}

</mosaic_0001>

<llo_original>
// kernel: gcn_forward_fused.1
$region0: #{gcn_forward_fused.1}
  #allocation0 [shape = 'u32[]', space=smem, size = 0x4, offset = 0x4, fixed_abs, tag = 'smem constant byte address 0x4 - core index']
  #allocation1 [shape = 'u32[72,128]{1,0:T(1,128)}', space=vmem, size = 0x9000, scoped, tag = 'internal scratch']
  #allocation2 [shape = 'bf16[2,256,128]{2,1,0:T(8,128)(2,1)}', space=vmem, size = 0x20000, scoped, tag = 'scratch operand']
  #allocation3 [shape = 'f32[256,128]{1,0:T(8,128)}', space=vmem, size = 0x20000, scoped, tag = 'scratch operand']
  #allocation4 [shape = 's8[1,1,256,256]{3,2,1,0:T(32,128)(4,1)}', space=vmem, size = 0x10000, scoped, tag = 'scratch operand']
  #allocation6 [shape = 's32[]', space=sflag, size = 0x4, offset = 0, fixed_abs, tag = 'sflag constant byte address 0x0 - dummy sync flag']
  #allocation8 [shape = 's32[]', space=sflag, size = 0x4, offset = 0, fixed_abs, tag = 'sflag constant byte address 0x0 - dummy sync flag']
  %s0 = inlined_call_operand.vmem [shape: s8[1,1,256,256], index: 0, kind: input, shape index: {}]
  %s1 = inlined_call_operand.vmem [shape: bf16[256,128], index: 1, kind: input, shape index: {}]
  %s2 = inlined_call_operand.vmem [shape: f32[256,1], index: 2, kind: input, shape index: {}]
  %s3 = inlined_call_operand.vmem [shape: f32[2,128,128], index: 3, kind: input, shape index: {}]
  %s4 = inlined_call_operand.vmem [shape: f32[2,1,128], index: 4, kind: input, shape index: {}]
  %s5 = inlined_call_operand.vmem [shape: bf16[256,128], index: 5, kind: output, shape index: {}]
  %s6 = sld [smem:[#allocation0]]
  $region105: #{gcn_forward_fused.1} parent=0
    _
  %s8 = ssub.s32 1, %s6
  %s9 = scalar_select 0, %s8, %s6
  loop: start=0, step=1, limit=4
  $region2: #{gcn_forward_fused.1} parent=0 // loop_pre_header
    _
  $region3: #{gcn_forward_fused.1} parent=0 // loop_header
    %s11 = sphi 0, %s15
    %p12 = scmp.ge.s32.totalorder %s11, 4
    %s18 = sphi 0, %s37
    %s19 = sphi 0, %s33
    %s20 = sphi 0, %s29
    %s21 = sphi 0, %s18
    %s22 = sphi 0, %s19
    %s23 = sphi 0, %s20
    %s24 = sphi 0, %s21
    %s25 = sphi 0, %s22
    %s26 = sphi 0, %s23
    %s40 = sphi 0, %s42
    %s43 = sphi 0, %s40
    %s44 = sphi 0, %s43
    %s60 = sphi 0, %s44
    %s66 = sphi 0, %s68
    %s69 = sphi 0, %s66
    %s70 = sphi 0, %s69
    %s86 = sphi 0, %s70
    %s92 = sphi 0, %s94
    %s95 = sphi 0, %s92
    %s96 = sphi 0, %s95
    %s112 = sphi 0, %s96
    %s118 = sphi 0, %s120
    %s121 = sphi 0, %s118
    %s122 = sphi 0, %s121
    %s138 = sphi 0, %s122
  $region4: #{gcn_forward_fused.1} parent=0 // loop_header_branch
    %14 = sbr.rel (%p12) target = $region8
  $region5: #{gcn_forward_fused.1} parent=0 // loop_body
    %s16 = ssub.s32 %s11, 1
    %s17 = ssub.s32 %s11, 2
    %s27 = sadd.s32 1, %s20
    %p28 = scmp.ge.s32.totalorder %s27, 1
    %s29 = scalar_select %p28, 0, %s27
    %s30 = sadd.s32 1, %s19
    %s31 = scalar_select %p28, %s30, %s19
    %p32 = scmp.ge.s32.totalorder %s31, 1
    %s33 = scalar_select %p32, 0, %s31
    %s34 = sadd.s32 1, %s18
    %s35 = scalar_select %p32, %s34, %s18
    %p36 = scmp.ge.s32.totalorder %s35, 2
    %s37 = scalar_select %p36, 0, %s35
    %s38 = ssub.s32 %s19, %s33
    %p39 = scmp.eq.s32.totalorder %s38, 0
    %s41 = sadd.s32 %s40, 1
    %s42 = scalar_select %p39, %s40, %s41
    %p45 = pneg %p39
    %p46 = scmp.eq.s32.totalorder %s11, 1
    %p47 = por %p45, %p46
    %p48 = scmp.ne.s32.totalorder %s40, %s43
    %p49 = scmp.eq.s32.totalorder %s11, 0
    %p50 = por %p48, %p49
    %p51 = scmp.ne.s32.totalorder %s40, %s43
    %p52 = scmp.eq.s32.totalorder %s16, 1
    %p53 = por %p51, %p52
    %p54 = scmp.ne.s32.totalorder %s43, %s44
    %p55 = scmp.eq.s32.totalorder %s16, 0
    %p56 = por %p54, %p55
    %p57 = scmp.ne.s32.totalorder %s43, %s44
    %p58 = scmp.eq.s32.totalorder %s17, 1
    %p59 = por %p57, %p58
    %p61 = scmp.ne.s32.totalorder %s44, %s60
    %p62 = scmp.eq.s32.totalorder %s17, 0
    %p63 = por %p61, %p62
    %s64 = ssub.s32 %s18, %s37
    %p65 = scmp.eq.s32.totalorder %s64, 0
    %s67 = sadd.s32 %s66, 1
    %s68 = scalar_select %p65, %s66, %s67
    %p71 = pneg %p65
    %p72 = scmp.eq.s32.totalorder %s11, 1
    %p73 = por %p71, %p72
    %p74 = scmp.ne.s32.totalorder %s66, %s69
    %p75 = scmp.eq.s32.totalorder %s11, 0
    %p76 = por %p74, %p75
    %p77 = scmp.ne.s32.totalorder %s66, %s69
    %p78 = scmp.eq.s32.totalorder %s16, 1
    %p79 = por %p77, %p78
    %p80 = scmp.ne.s32.totalorder %s69, %s70
    %p81 = scmp.eq.s32.totalorder %s16, 0
    %p82 = por %p80, %p81
    %p83 = scmp.ne.s32.totalorder %s69, %s70
    %p84 = scmp.eq.s32.totalorder %s17, 1
    %p85 = por %p83, %p84
    %p87 = scmp.ne.s32.totalorder %s70, %s86
    %p88 = scmp.eq.s32.totalorder %s17, 0
    %p89 = por %p87, %p88
    %s90 = ssub.s32 %s18, %s37
    %p91 = scmp.eq.s32.totalorder %s90, 0
    %s93 = sadd.s32 %s92, 1
    %s94 = scalar_select %p91, %s92, %s93
    %p97 = pneg %p91
    %p98 = scmp.eq.s32.totalorder %s11, 1
    %p99 = por %p97, %p98
    %p100 = scmp.ne.s32.totalorder %s92, %s95
    %p101 = scmp.eq.s32.totalorder %s11, 0
    %p102 = por %p100, %p101
    %p103 = scmp.ne.s32.totalorder %s92, %s95
    %p104 = scmp.eq.s32.totalorder %s16, 1
    %p105 = por %p103, %p104
    %p106 = scmp.ne.s32.totalorder %s95, %s96
    %p107 = scmp.eq.s32.totalorder %s16, 0
    %p108 = por %p106, %p107
    %p109 = scmp.ne.s32.totalorder %s95, %s96
    %p110 = scmp.eq.s32.totalorder %s17, 1
    %p111 = por %p109, %p110
    %p113 = scmp.ne.s32.totalorder %s96, %s112
    %p114 = scmp.eq.s32.totalorder %s17, 0
    %p115 = por %p113, %p114
    %s116 = ssub.s32 %s19, %s33
    %p117 = scmp.eq.s32.totalorder %s116, 0
    %s119 = sadd.s32 %s118, 1
    %s120 = scalar_select %p117, %s118, %s119
    %p123 = pneg %p117
    %p124 = scmp.eq.s32.totalorder %s11, 1
    %p125 = por %p123, %p124
    %p126 = scmp.ne.s32.totalorder %s118, %s121
    %p127 = scmp.eq.s32.totalorder %s11, 0
    %p128 = por %p126, %p127
    %p129 = scmp.ne.s32.totalorder %s118, %s121
    %p130 = scmp.eq.s32.totalorder %s16, 1
    %p131 = por %p129, %p130
    %p132 = scmp.ne.s32.totalorder %s121, %s122
    %p133 = scmp.eq.s32.totalorder %s16, 0
    %p134 = por %p132, %p133
    %p135 = scmp.ne.s32.totalorder %s121, %s122
    %p136 = scmp.eq.s32.totalorder %s17, 1
    %p137 = por %p135, %p136
    %p139 = scmp.ne.s32.totalorder %s122, %s138
    %p140 = scmp.eq.s32.totalorder %s17, 0
    %p141 = por %p139, %p140
    %p142 = scmp.le.s32.totalorder 1, %s11
    %p143 = scmp.lt.s32.totalorder %s11, 3
    %p144 = pnand %p142, %p143
    %p145 = pneg %p144
    // Predicated region
    $region9: #{gcn_forward_fused.1} parent=5 // pred_check
      _
    $region10: #{gcn_forward_fused.1} parent=5 // pred_check_branch
      %147 = sbr.rel (%p144) target = $region12
    $region11: #{gcn_forward_fused.1} parent=5 // pred_region
      %s148 = ssub.s32 %s11, 1
      // Predicated region
      $region13: #{gcn_forward_fused.1} parent=11 // pred_check
        %p149 = pneg %p56
      $region14: #{gcn_forward_fused.1} parent=11 // pred_check_branch
        %151 = sbr.rel (%p149) target = $region16
      $region15: #{gcn_forward_fused.1} parent=11 // pred_region
        %s152 = smul.u32 32, %s22
        %p153 = scmp.lt.s32.totalorder %s152, 31
        %s154 = scalar_select %p153, %s152, 31
        %s155 = smul.addr %s154, 8
        %s156 = scalar_lea.vmem %s2, %s155
        %s157 = smul.u32 32, %s22
      $region16: #{gcn_forward_fused.1} parent=11 // pred_fallthru
        _
    $region12: #{gcn_forward_fused.1} parent=5 // pred_fallthru
      _
    %p158 = scmp.lt.s32.totalorder %s11, 2
    // Predicated region
    $region17: #{gcn_forward_fused.1} parent=5 // pred_check
      %p159 = pneg %p158
    $region18: #{gcn_forward_fused.1} parent=5 // pred_check_branch
      %161 = sbr.rel (%p159) target = $region20
    $region19: #{gcn_forward_fused.1} parent=5 // pred_region
      // Predicated region
      $region21: #{gcn_forward_fused.1} parent=19 // pred_check
        %p162 = pneg %p76
      $region22: #{gcn_forward_fused.1} parent=19 // pred_check_branch
        %164 = sbr.rel (%p162) target = $region24
      $region23: #{gcn_forward_fused.1} parent=19 // pred_region
        %p165 = scmp.lt.s32.totalorder %s18, 1
        %s166 = scalar_select %p165, %s18, 1
        %s167 = smul.addr %s166, 16
        %s168 = smul.addr %s167, 8
        %s169 = scalar_lea.vmem %s3, %s168
      $region24: #{gcn_forward_fused.1} parent=19 // pred_fallthru
        _
      // Predicated region
      $region25: #{gcn_forward_fused.1} parent=19 // pred_check
        %p170 = pneg %p102
      $region26: #{gcn_forward_fused.1} parent=19 // pred_check_branch
        %172 = sbr.rel (%p170) target = $region28
      $region27: #{gcn_forward_fused.1} parent=19 // pred_region
        %p173 = scmp.lt.s32.totalorder %s18, 1
        %s174 = scalar_select %p173, %s18, 1
        %s175 = scalar_lea.vmem %s4, %s174
      $region28: #{gcn_forward_fused.1} parent=19 // pred_fallthru
        _
    $region20: #{gcn_forward_fused.1} parent=5 // pred_fallthru
      _
    %p176 = scmp.le.s32.totalorder 1, %s11
    %p177 = scmp.lt.s32.totalorder %s11, 3
    %p178 = pnand %p176, %p177
    %p179 = pneg %p178
    // Predicated region
    $region29: #{gcn_forward_fused.1} parent=5 // pred_check
      _
    $region30: #{gcn_forward_fused.1} parent=5 // pred_check_branch
      %181 = sbr.rel (%p178) target = $region32
    $region31: #{gcn_forward_fused.1} parent=5 // pred_region
      %s182 = ssub.s32 %s11, 1
      %s183 = smul.u32 32, %s22
      %p184 = scmp.lt.s32.totalorder %s183, 31
      %s185 = scalar_select %p184, %s183, 31
      %s186 = smul.addr %s185, 8
      %s187 = scalar_lea.vmem %s2, %s186
      %p188 = pneg %p56
      %p189 = pneg %p53
      %p190 = scmp.lt.s32.totalorder %s21, 1
      %s191 = scalar_select %p190, %s21, 1
      %s192 = smul.addr %s191, 16
      %s193 = smul.addr %s192, 8
      %s194 = scalar_lea.vmem %s3, %s193
      %p195 = pneg %p82
      %p196 = pneg %p79
      %p197 = scmp.lt.s32.totalorder %s21, 1
      %s198 = scalar_select %p197, %s21, 1
      %s199 = scalar_lea.vmem %s4, %s198
      %p200 = pneg %p108
      %p201 = pneg %p105
      %p202 = pneg %p134
      %p203 = pneg %p131
      %s204 = smul.u32 32, %s22
      %p205 = scmp.lt.s32.totalorder %s204, 31
      %s206 = scalar_select %p205, %s204, 31
      %s207 = smul.addr %s206, 4
      %s208 = scalar_lea.vmem %s5, %s207
      %s209 = smul.u32 32, %s22
      %p210 = scmp.lt.s32.totalorder %s209, 31
      %s211 = scalar_select %p210, %s209, 31
      %s212 = smul.addr %s211, 8
      %s213 = scalar_lea.vmem %s2, %s212
      %s214 = smul.u32 32, %s22
      %p215 = scmp.lt.s32.totalorder %s21, 1
      %s216 = scalar_select %p215, %s21, 1
      %s217 = smul.addr %s216, 16
      %s218 = smul.addr %s217, 8
      %s219 = scalar_lea.vmem %s3, %s218
      %p220 = scmp.lt.s32.totalorder %s21, 1
      %s221 = scalar_select %p220, %s21, 1
      %s222 = scalar_lea.vmem %s4, %s221
      %s223 = smul.u32 32, %s22
      %p224 = scmp.lt.s32.totalorder %s223, 31
      %s225 = scalar_select %p224, %s223, 31
      %s226 = smul.addr %s225, 4
      %s227 = scalar_lea.vmem %s5, %s226
      %s228 = smul.u32 32, %s22
      %p229 = scmp.eq.s32.totalorder %s21, 0
      %p230 = scmp.eq.s32.totalorder %s22, 0
      %p231 = pnand %p229, %p230
      %p232 = pneg %p231
      %p233 = scmp.eq.s32.totalorder %s23, 0
      %p234 = pnand %p232, %p233
      %p235 = pneg %p234
      // Predicated region
      $region33: #{gcn_forward_fused.1} parent=31 // pred_check
        _
      $region34: #{gcn_forward_fused.1} parent=31 // pred_check_branch
        %237 = sbr.rel (%p234) target = $region36
      $region35: #{gcn_forward_fused.1} parent=31 // pred_region
        $region37: #{gcn_forward_fused.1} parent=35
          #allocation5 [shape = 's32[1]{0}', space=sflag, size = 0x4, scoped, tag = 'scoped memory for gcn_forward_fused.1']
          // Predicated region
          $region38: #{gcn_forward_fused.1} parent=37 // pred_check
            _
          $region39: #{gcn_forward_fused.1} parent=37 // pred_check_branch
            %239 = sbr.rel (0) target = $region41
          $region40: #{gcn_forward_fused.1} parent=37 // pred_region
            loop: start=0, step=1, limit=1
            $region42: #{gcn_forward_fused.1} parent=40 // loop_pre_header
              _
            $region43: #{gcn_forward_fused.1} parent=40 // loop_header
              %s241 = sphi 0, %s245
              %p242 = scmp.ge.s32.totalorder %s241, 1
              %s246 = sphi %s1, %s1
              %s247 = sphi [#allocation2], [#allocation2]
            $region44: #{gcn_forward_fused.1} parent=40 // loop_header_branch
              %244 = sbr.rel (%p242) target = $region48
            $region45: #{gcn_forward_fused.1} parent=40 // loop_body
              %v248 = vld [vmem:[%s246] sm:$0xff]
              %249 = vst [vmem:[%s247] sm:$0xff] %v248
              %v250 = vld [vmem:[%s246 + $0x8] sm:$0xff]
              %251 = vst [vmem:[%s247 + $0x8] sm:$0xff] %v250
              %v252 = vld [vmem:[%s246 + $0x10] sm:$0xff]
              %253 = vst [vmem:[%s247 + $0x10] sm:$0xff] %v252
              %v254 = vld [vmem:[%s246 + $0x18] sm:$0xff]
              %255 = vst [vmem:[%s247 + $0x18] sm:$0xff] %v254
              %v256 = vld [vmem:[%s246 + $0x20] sm:$0xff]
              %257 = vst [vmem:[%s247 + $0x20] sm:$0xff] %v256
              %v258 = vld [vmem:[%s246 + $0x28] sm:$0xff]
              %259 = vst [vmem:[%s247 + $0x28] sm:$0xff] %v258
              %v260 = vld [vmem:[%s246 + $0x30] sm:$0xff]
              %261 = vst [vmem:[%s247 + $0x30] sm:$0xff] %v260
              %v262 = vld [vmem:[%s246 + $0x38] sm:$0xff]
              %263 = vst [vmem:[%s247 + $0x38] sm:$0xff] %v262
              %v264 = vld [vmem:[%s246 + $0x40] sm:$0xff]
              %265 = vst [vmem:[%s247 + $0x40] sm:$0xff] %v264
              %v266 = vld [vmem:[%s246 + $0x48] sm:$0xff]
              %267 = vst [vmem:[%s247 + $0x48] sm:$0xff] %v266
              %v268 = vld [vmem:[%s246 + $0x50] sm:$0xff]
              %269 = vst [vmem:[%s247 + $0x50] sm:$0xff] %v268
              %v270 = vld [vmem:[%s246 + $0x58] sm:$0xff]
              %271 = vst [vmem:[%s247 + $0x58] sm:$0xff] %v270
              %v272 = vld [vmem:[%s246 + $0x60] sm:$0xff]
              %273 = vst [vmem:[%s247 + $0x60] sm:$0xff] %v272
              %v274 = vld [vmem:[%s246 + $0x68] sm:$0xff]
              %275 = vst [vmem:[%s247 + $0x68] sm:$0xff] %v274
              %v276 = vld [vmem:[%s246 + $0x70] sm:$0xff]
              %277 = vst [vmem:[%s247 + $0x70] sm:$0xff] %v276
              %v278 = vld [vmem:[%s246 + $0x78] sm:$0xff]
              %279 = vst [vmem:[%s247 + $0x78] sm:$0xff] %v278
            $region46: #{gcn_forward_fused.1} parent=40 // loop_footer
              %s245 = sadd.s32 1, %s241
            $region47: #{gcn_forward_fused.1} parent=40 // loop_footer_branch
              %240 = sbr.rel target = $region43
            $region48: #{gcn_forward_fused.1} parent=40 // loop_exit
              _
          $region41: #{gcn_forward_fused.1} parent=37 // pred_fallthru
            _
          // Predicated region
          $region49: #{gcn_forward_fused.1} parent=37 // pred_check
            _
          $region50: #{gcn_forward_fused.1} parent=37 // pred_check_branch
            %281 = sbr.rel target = $region52
          $region51: #{gcn_forward_fused.1} parent=37 // pred_region
            _
          $region52: #{gcn_forward_fused.1} parent=37 // pred_fallthru
            _
          // Predicated region
          $region53: #{gcn_forward_fused.1} parent=37 // pred_check
            _
          $region54: #{gcn_forward_fused.1} parent=37 // pred_check_branch
            %284 = sbr.rel (0) target = $region56
          $region55: #{gcn_forward_fused.1} parent=37 // pred_region
            %285 = vsyncadd [#allocation5], 2048
          $region56: #{gcn_forward_fused.1} parent=37 // pred_fallthru
            _
          %s286 = smul.u32 4, 32
          %s287 = smul.u32 %s286, 1
          %s288 = sshll.u32 %s287, 4
          %289 = dma.done [#allocation5], %s288
        $region57: #{gcn_forward_fused.1} parent=35
          #allocation7 [shape = 's32[1]{0}', space=sflag, size = 0x4, scoped, tag = 'scoped memory for gcn_forward_fused.1']
          // Predicated region
          $region58: #{gcn_forward_fused.1} parent=57 // pred_check
            _
          $region59: #{gcn_forward_fused.1} parent=57 // pred_check_branch
            %291 = sbr.rel (0) target = $region61
          $region60: #{gcn_forward_fused.1} parent=57 // pred_region
            loop: start=0, step=1, limit=1
            $region62: #{gcn_forward_fused.1} parent=60 // loop_pre_header
              _
            $region63: #{gcn_forward_fused.1} parent=60 // loop_header
              %s293 = sphi 0, %s297
              %p294 = scmp.ge.s32.totalorder %s293, 1
              %s298 = sphi %s0, %s0
              %s299 = sphi [#allocation4], [#allocation4]
            $region64: #{gcn_forward_fused.1} parent=60 // loop_header_branch
              %296 = sbr.rel (%p294) target = $region68
            $region65: #{gcn_forward_fused.1} parent=60 // loop_body
              %v300 = vld [vmem:[%s298] sm:$0xff]
              %301 = vst [vmem:[%s299] sm:$0xff] %v300
              %v302 = vld [vmem:[%s298 + $0x8] sm:$0xff]
              %303 = vst [vmem:[%s299 + $0x8] sm:$0xff] %v302
              %v304 = vld [vmem:[%s298 + $0x10] sm:$0xff]
              %305 = vst [vmem:[%s299 + $0x10] sm:$0xff] %v304
              %v306 = vld [vmem:[%s298 + $0x18] sm:$0xff]
              %307 = vst [vmem:[%s299 + $0x18] sm:$0xff] %v306
              %v308 = vld [vmem:[%s298 + $0x20] sm:$0xff]
              %309 = vst [vmem:[%s299 + $0x20] sm:$0xff] %v308
              %v310 = vld [vmem:[%s298 + $0x28] sm:$0xff]
              %311 = vst [vmem:[%s299 + $0x28] sm:$0xff] %v310
              %v312 = vld [vmem:[%s298 + $0x30] sm:$0xff]
              %313 = vst [vmem:[%s299 + $0x30] sm:$0xff] %v312
              %v314 = vld [vmem:[%s298 + $0x38] sm:$0xff]
              %315 = vst [vmem:[%s299 + $0x38] sm:$0xff] %v314
              %v316 = vld [vmem:[%s298 + $0x40] sm:$0xff]
              %317 = vst [vmem:[%s299 + $0x40] sm:$0xff] %v316
              %v318 = vld [vmem:[%s298 + $0x48] sm:$0xff]
              %319 = vst [vmem:[%s299 + $0x48] sm:$0xff] %v318
              %v320 = vld [vmem:[%s298 + $0x50] sm:$0xff]
              %321 = vst [vmem:[%s299 + $0x50] sm:$0xff] %v320
              %v322 = vld [vmem:[%s298 + $0x58] sm:$0xff]
              %323 = vst [vmem:[%s299 + $0x58] sm:$0xff] %v322
              %v324 = vld [vmem:[%s298 + $0x60] sm:$0xff]
              %325 = vst [vmem:[%s299 + $0x60] sm:$0xff] %v324
              %v326 = vld [vmem:[%s298 + $0x68] sm:$0xff]
              %327 = vst [vmem:[%s299 + $0x68] sm:$0xff] %v326
              %v328 = vld [vmem:[%s298 + $0x70] sm:$0xff]
              %329 = vst [vmem:[%s299 + $0x70] sm:$0xff] %v328
              %v330 = vld [vmem:[%s298 + $0x78] sm:$0xff]
              %331 = vst [vmem:[%s299 + $0x78] sm:$0xff] %v330
            $region66: #{gcn_forward_fused.1} parent=60 // loop_footer
              %s297 = sadd.s32 1, %s293
            $region67: #{gcn_forward_fused.1} parent=60 // loop_footer_branch
              %292 = sbr.rel target = $region63
            $region68: #{gcn_forward_fused.1} parent=60 // loop_exit
              _
          $region61: #{gcn_forward_fused.1} parent=57 // pred_fallthru
            _
          // Predicated region
          $region69: #{gcn_forward_fused.1} parent=57 // pred_check
            _
          $region70: #{gcn_forward_fused.1} parent=57 // pred_check_branch
            %333 = sbr.rel target = $region72
          $region71: #{gcn_forward_fused.1} parent=57 // pred_region
            _
          $region72: #{gcn_forward_fused.1} parent=57 // pred_fallthru
            _
          // Predicated region
          $region73: #{gcn_forward_fused.1} parent=57 // pred_check
            _
          $region74: #{gcn_forward_fused.1} parent=57 // pred_check_branch
            %336 = sbr.rel (0) target = $region76
          $region75: #{gcn_forward_fused.1} parent=57 // pred_region
            %337 = vsyncadd [#allocation7], 2048
          $region76: #{gcn_forward_fused.1} parent=57 // pred_fallthru
            _
          %s338 = smul.u32 2, 1
          %s339 = smul.u32 %s338, 1
          %s340 = smul.u32 %s339, 32
          %s341 = smul.u32 %s340, 2
          %s342 = sshll.u32 %s341, 4
          %343 = dma.done [#allocation7], %s342
      $region36: #{gcn_forward_fused.1} parent=31 // pred_fallthru
        _
      %p344 = scmp.lt.s32.totalorder %s21, 0
      %s345 = ssub.s32 0, %s21
      %s346 = scalar_select %p344, %s345, %s21
      %s347 = sand.u32 %s346, 1
      %s348 = ssub.s32 0, %s347
      %s349 = scalar_select %p344, %s348, %s347
      %p350 = scmp.ne.s32.totalorder %s349, 0
      %p351 = scmp.lt.s32.totalorder %s349, 0
      %p352 = pnand %p351, %p350
      %p353 = pneg %p352
      %s354 = sadd.s32 %s349, 2
      %s355 = scalar_select %p353, %s354, %s349
      %s356 = smul.u32 %s23, 256
      %s357 = sshra.s32 %s356, 3
      %s358 = sand.u32 %s356, 7
      %s359 = smul.u32 %s355, 32
      %s360 = sadd.s32 %s357, %s359
      %s361 = smul.addr %s360, 4
      %s362 = scalar_lea.vmem [#allocation2], %s361
      %v363 = vld [vmem:[%s362] sm:$0xf]
      %v364 = vld [vmem:[%s362 + $0x4] sm:$0xf]
      %v365 = vld [vmem:[%s362 + $0x8] sm:$0xf]
      %v366 = vld [vmem:[%s362 + $0xc] sm:$0xf]
      %v367 = vld [vmem:[%s362 + $0x10] sm:$0xf]
      %v368 = vld [vmem:[%s362 + $0x14] sm:$0xf]
      %v369 = vld [vmem:[%s362 + $0x18] sm:$0xf]
      %v370 = vld [vmem:[%s362 + $0x1c] sm:$0xf]
      %v371 = vld [vmem:[%s362 + $0x20] sm:$0xf]
      %v372 = vld [vmem:[%s362 + $0x24] sm:$0xf]
      %v373 = vld [vmem:[%s362 + $0x28] sm:$0xf]
      %v374 = vld [vmem:[%s362 + $0x2c] sm:$0xf]
      %v375 = vld [vmem:[%s362 + $0x30] sm:$0xf]
      %v376 = vld [vmem:[%s362 + $0x34] sm:$0xf]
      %v377 = vld [vmem:[%s362 + $0x38] sm:$0xf]
      %v378 = vld [vmem:[%s362 + $0x3c] sm:$0xf]
      %v379 = vld [vmem:[%s362 + $0x40] sm:$0xf]
      %v380 = vld [vmem:[%s362 + $0x44] sm:$0xf]
      %v381 = vld [vmem:[%s362 + $0x48] sm:$0xf]
      %v382 = vld [vmem:[%s362 + $0x4c] sm:$0xf]
      %v383 = vld [vmem:[%s362 + $0x50] sm:$0xf]
      %v384 = vld [vmem:[%s362 + $0x54] sm:$0xf]
      %v385 = vld [vmem:[%s362 + $0x58] sm:$0xf]
      %v386 = vld [vmem:[%s362 + $0x5c] sm:$0xf]
      %v387 = vld [vmem:[%s362 + $0x60] sm:$0xf]
      %v388 = vld [vmem:[%s362 + $0x64] sm:$0xf]
      %v389 = vld [vmem:[%s362 + $0x68] sm:$0xf]
      %v390 = vld [vmem:[%s362 + $0x6c] sm:$0xf]
      %v391 = vld [vmem:[%s362 + $0x70] sm:$0xf]
      %v392 = vld [vmem:[%s362 + $0x74] sm:$0xf]
      %v393 = vld [vmem:[%s362 + $0x78] sm:$0xf]
      %v394 = vld [vmem:[%s362 + $0x7c] sm:$0xf]
      %s395 = smul.u32 %s23, 16
      %s396 = smul.u32 %s22, 16
      %s397 = sadd.s32 %s395, %s396
      %s398 = smul.addr %s397, 8
      %s399 = scalar_lea.vmem [#allocation4], %s398
      %v400 = vld [vmem:[%s399] sm:$0xff]
      %v401 = vld [vmem:[%s399 + $0x8] sm:$0xff]
      %v402 = vld [vmem:[%s399 + $0x10] sm:$0xff]
      %v403 = vld [vmem:[%s399 + $0x18] sm:$0xff]
      %v404 = vld [vmem:[%s399 + $0x20] sm:$0xff]
      %v405 = vld [vmem:[%s399 + $0x28] sm:$0xff]
      %v406 = vld [vmem:[%s399 + $0x30] sm:$0xff]
      %v407 = vld [vmem:[%s399 + $0x38] sm:$0xff]
      %v408 = vld [vmem:[%s399 + $0x40] sm:$0xff]
      %v409 = vld [vmem:[%s399 + $0x48] sm:$0xff]
      %v410 = vld [vmem:[%s399 + $0x50] sm:$0xff]
      %v411 = vld [vmem:[%s399 + $0x58] sm:$0xff]
      %v412 = vld [vmem:[%s399 + $0x60] sm:$0xff]
      %v413 = vld [vmem:[%s399 + $0x68] sm:$0xff]
      %v414 = vld [vmem:[%s399 + $0x70] sm:$0xff]
      %v415 = vld [vmem:[%s399 + $0x78] sm:$0xff]
      %v416 = vunpack.c.0.s8 %v400
      %v417 = vunpack.c.0.s8 %v401
      %v418 = vunpack.c.1.s8 %v400
      %v419 = vunpack.c.1.s8 %v401
      %v420 = vunpack.c.2.s8 %v400
      %v421 = vunpack.c.2.s8 %v401
      %v422 = vunpack.c.3.s8 %v400
      %v423 = vunpack.c.3.s8 %v401
      %v424 = vunpack.c.0.s8 %v402
      %v425 = vunpack.c.0.s8 %v403
      %v426 = vunpack.c.1.s8 %v402
      %v427 = vunpack.c.1.s8 %v403
      %v428 = vunpack.c.2.s8 %v402
      %v429 = vunpack.c.2.s8 %v403
      %v430 = vunpack.c.3.s8 %v402
      %v431 = vunpack.c.3.s8 %v403
      %v432 = vunpack.c.0.s8 %v404
      %v433 = vunpack.c.0.s8 %v405
      %v434 = vunpack.c.1.s8 %v404
      %v435 = vunpack.c.1.s8 %v405
      %v436 = vunpack.c.2.s8 %v404
      %v437 = vunpack.c.2.s8 %v405
      %v438 = vunpack.c.3.s8 %v404
      %v439 = vunpack.c.3.s8 %v405
      %v440 = vunpack.c.0.s8 %v406
      %v441 = vunpack.c.0.s8 %v407
      %v442 = vunpack.c.1.s8 %v406
      %v443 = vunpack.c.1.s8 %v407
      %v444 = vunpack.c.2.s8 %v406
      %v445 = vunpack.c.2.s8 %v407
      %v446 = vunpack.c.3.s8 %v406
      %v447 = vunpack.c.3.s8 %v407
      %v448 = vunpack.c.0.s8 %v408
      %v449 = vunpack.c.0.s8 %v409
      %v450 = vunpack.c.1.s8 %v408
      %v451 = vunpack.c.1.s8 %v409
      %v452 = vunpack.c.2.s8 %v408
      %v453 = vunpack.c.2.s8 %v409
      %v454 = vunpack.c.3.s8 %v408
      %v455 = vunpack.c.3.s8 %v409
      %v456 = vunpack.c.0.s8 %v410
      %v457 = vunpack.c.0.s8 %v411
      %v458 = vunpack.c.1.s8 %v410
      %v459 = vunpack.c.1.s8 %v411
      %v460 = vunpack.c.2.s8 %v410
      %v461 = vunpack.c.2.s8 %v411
      %v462 = vunpack.c.3.s8 %v410
      %v463 = vunpack.c.3.s8 %v411
      %v464 = vunpack.c.0.s8 %v412
      %v465 = vunpack.c.0.s8 %v413
      %v466 = vunpack.c.1.s8 %v412
      %v467 = vunpack.c.1.s8 %v413
      %v468 = vunpack.c.2.s8 %v412
      %v469 = vunpack.c.2.s8 %v413
      %v470 = vunpack.c.3.s8 %v412
      %v471 = vunpack.c.3.s8 %v413
      %v472 = vunpack.c.0.s8 %v414
      %v473 = vunpack.c.0.s8 %v415
      %v474 = vunpack.c.1.s8 %v414
      %v475 = vunpack.c.1.s8 %v415
      %v476 = vunpack.c.2.s8 %v414
      %v477 = vunpack.c.2.s8 %v415
      %v478 = vunpack.c.3.s8 %v414
      %v479 = vunpack.c.3.s8 %v415
      %v480 = vcvt.s32.f32 %v416
      %v481 = vcvt.s32.f32 %v417
      %v482 = vcvt.s32.f32 %v418
      %v483 = vcvt.s32.f32 %v419
      %v484 = vcvt.s32.f32 %v420
      %v485 = vcvt.s32.f32 %v421
      %v486 = vcvt.s32.f32 %v422
      %v487 = vcvt.s32.f32 %v423
      %v488 = vcvt.s32.f32 %v424
      %v489 = vcvt.s32.f32 %v425
      %v490 = vcvt.s32.f32 %v426
      %v491 = vcvt.s32.f32 %v427
      %v492 = vcvt.s32.f32 %v428
      %v493 = vcvt.s32.f32 %v429
      %v494 = vcvt.s32.f32 %v430
      %v495 = vcvt.s32.f32 %v431
      %v496 = vcvt.s32.f32 %v432
      %v497 = vcvt.s32.f32 %v433
      %v498 = vcvt.s32.f32 %v434
      %v499 = vcvt.s32.f32 %v435
      %v500 = vcvt.s32.f32 %v436
      %v501 = vcvt.s32.f32 %v437
      %v502 = vcvt.s32.f32 %v438
      %v503 = vcvt.s32.f32 %v439
      %v504 = vcvt.s32.f32 %v440
      %v505 = vcvt.s32.f32 %v441
      %v506 = vcvt.s32.f32 %v442
      %v507 = vcvt.s32.f32 %v443
      %v508 = vcvt.s32.f32 %v444
      %v509 = vcvt.s32.f32 %v445
      %v510 = vcvt.s32.f32 %v446
      %v511 = vcvt.s32.f32 %v447
      %v512 = vcvt.s32.f32 %v448
      %v513 = vcvt.s32.f32 %v449
      %v514 = vcvt.s32.f32 %v450
      %v515 = vcvt.s32.f32 %v451
      %v516 = vcvt.s32.f32 %v452
      %v517 = vcvt.s32.f32 %v453
      %v518 = vcvt.s32.f32 %v454
      %v519 = vcvt.s32.f32 %v455
      %v520 = vcvt.s32.f32 %v456
      %v521 = vcvt.s32.f32 %v457
      %v522 = vcvt.s32.f32 %v458
      %v523 = vcvt.s32.f32 %v459
      %v524 = vcvt.s32.f32 %v460
      %v525 = vcvt.s32.f32 %v461
      %v526 = vcvt.s32.f32 %v462
      %v527 = vcvt.s32.f32 %v463
      %v528 = vcvt.s32.f32 %v464
      %v529 = vcvt.s32.f32 %v465
      %v530 = vcvt.s32.f32 %v466
      %v531 = vcvt.s32.f32 %v467
      %v532 = vcvt.s32.f32 %v468
      %v533 = vcvt.s32.f32 %v469
      %v534 = vcvt.s32.f32 %v470
      %v535 = vcvt.s32.f32 %v471
      %v536 = vcvt.s32.f32 %v472
      %v537 = vcvt.s32.f32 %v473
      %v538 = vcvt.s32.f32 %v474
      %v539 = vcvt.s32.f32 %v475
      %v540 = vcvt.s32.f32 %v476
      %v541 = vcvt.s32.f32 %v477
      %v542 = vcvt.s32.f32 %v478
      %v543 = vcvt.s32.f32 %v479
      %v544 = vpack.c.bf16 %v482, %v480
      %v545 = vpack.c.bf16 %v483, %v481
      %v546 = vpack.c.bf16 %v486, %v484
      %v547 = vpack.c.bf16 %v487, %v485
      %v548 = vpack.c.bf16 %v490, %v488
      %v549 = vpack.c.bf16 %v491, %v489
      %v550 = vpack.c.bf16 %v494, %v492
      %v551 = vpack.c.bf16 %v495, %v493
      %v552 = vpack.c.bf16 %v498, %v496
      %v553 = vpack.c.bf16 %v499, %v497
      %v554 = vpack.c.bf16 %v502, %v500
      %v555 = vpack.c.bf16 %v503, %v501
      %v556 = vpack.c.bf16 %v506, %v504
      %v557 = vpack.c.bf16 %v507, %v505
      %v558 = vpack.c.bf16 %v510, %v508
      %v559 = vpack.c.bf16 %v511, %v509
      %v560 = vpack.c.bf16 %v514, %v512
      %v561 = vpack.c.bf16 %v515, %v513
      %v562 = vpack.c.bf16 %v518, %v516
      %v563 = vpack.c.bf16 %v519, %v517
      %v564 = vpack.c.bf16 %v522, %v520
      %v565 = vpack.c.bf16 %v523, %v521
      %v566 = vpack.c.bf16 %v526, %v524
      %v567 = vpack.c.bf16 %v527, %v525
      %v568 = vpack.c.bf16 %v530, %v528
      %v569 = vpack.c.bf16 %v531, %v529
      %v570 = vpack.c.bf16 %v534, %v532
      %v571 = vpack.c.bf16 %v535, %v533
      %v572 = vpack.c.bf16 %v538, %v536
      %v573 = vpack.c.bf16 %v539, %v537
      %v574 = vpack.c.bf16 %v542, %v540
      %v575 = vpack.c.bf16 %v543, %v541
      %v608 = vunpack.c.l.b16 %v363
      %v609 = vunpack.c.l.b16 %v364
      %v610 = vunpack.c.l.b16 %v365
      %v611 = vunpack.c.l.b16 %v366
      %v612 = vunpack.c.l.b16 %v367
      %v613 = vunpack.c.l.b16 %v368
      %v614 = vunpack.c.l.b16 %v369
      %v615 = vunpack.c.l.b16 %v370
      %v616 = vunpack.c.l.b16 %v371
      %v617 = vunpack.c.l.b16 %v372
      %v618 = vunpack.c.l.b16 %v373
      %v619 = vunpack.c.l.b16 %v374
      %v620 = vunpack.c.l.b16 %v375
      %v621 = vunpack.c.l.b16 %v376
      %v622 = vunpack.c.l.b16 %v377
      %v623 = vunpack.c.l.b16 %v378
      %v624 = vunpack.c.l.b16 %v379
      %v625 = vunpack.c.l.b16 %v380
      %v626 = vunpack.c.l.b16 %v381
      %v627 = vunpack.c.l.b16 %v382
      %v628 = vunpack.c.l.b16 %v383
      %v629 = vunpack.c.l.b16 %v384
      %v630 = vunpack.c.l.b16 %v385
      %v631 = vunpack.c.l.b16 %v386
      %v632 = vunpack.c.l.b16 %v387
      %v633 = vunpack.c.l.b16 %v388
      %v634 = vunpack.c.l.b16 %v389
      %v635 = vunpack.c.l.b16 %v390
      %v636 = vunpack.c.l.b16 %v391
      %v637 = vunpack.c.l.b16 %v392
      %v638 = vunpack.c.l.b16 %v393
      %v639 = vunpack.c.l.b16 %v394
      %v640 = vpack.c.b16 %v609, %v608
      %v641 = vpack.c.b16 %v611, %v610
      %v642 = vpack.c.b16 %v613, %v612
      %v643 = vpack.c.b16 %v615, %v614
      %v644 = vpack.c.b16 %v617, %v616
      %v645 = vpack.c.b16 %v619, %v618
      %v646 = vpack.c.b16 %v621, %v620
      %v647 = vpack.c.b16 %v623, %v622
      %v648 = vpack.c.b16 %v625, %v624
      %v649 = vpack.c.b16 %v627, %v626
      %v650 = vpack.c.b16 %v629, %v628
      %v651 = vpack.c.b16 %v631, %v630
      %v652 = vpack.c.b16 %v633, %v632
      %v653 = vpack.c.b16 %v635, %v634
      %v654 = vpack.c.b16 %v637, %v636
      %v655 = vpack.c.b16 %v639, %v638
      %672 = vmatpush.bf16.msra.mxu0 %v647
      %673 = vmatpush.bf16.msra.mxu0 %v646
      %674 = vmatpush.bf16.msra.mxu0 %v645
      %675 = vmatpush.bf16.msra.mxu0 %v644
      %676 = vmatpush.bf16.msra.mxu0 %v643
      %677 = vmatpush.bf16.msra.mxu0 %v642
      %678 = vmatpush.bf16.msra.mxu0 %v641
      %679 = vmatpush.bf16.msra.mxu0 %v640
      %680 = vmatmul.bf16.gmra.mxu0 %v544
      %v681 = vpop.f32.mrf.mxu0
      %v682 = vadd.f32 0.0, %v681
      %v683 = vpop.f32.mrf.mxu0
      %v684 = vadd.f32 0.0, %v683
      %685 = vmatmul.bf16.gmra.mxu0 %v546
      %v686 = vpop.f32.mrf.mxu0
      %v687 = vadd.f32 0.0, %v686
      %v688 = vpop.f32.mrf.mxu0
      %v689 = vadd.f32 0.0, %v688
      %690 = vmatmul.bf16.gmra.mxu0 %v548
      %v691 = vpop.f32.mrf.mxu0
      %v692 = vadd.f32 0.0, %v691
      %v693 = vpop.f32.mrf.mxu0
      %v694 = vadd.f32 0.0, %v693
      %695 = vmatmul.bf16.gmra.mxu0 %v550
      %v696 = vpop.f32.mrf.mxu0
      %v697 = vadd.f32 0.0, %v696
      %v698 = vpop.f32.mrf.mxu0
      %v699 = vadd.f32 0.0, %v698
      %700 = vmatmul.bf16.gmra.mxu0 %v552
      %v701 = vpop.f32.mrf.mxu0
      %v702 = vadd.f32 0.0, %v701
      %v703 = vpop.f32.mrf.mxu0
      %v704 = vadd.f32 0.0, %v703
      %705 = vmatmul.bf16.gmra.mxu0 %v554
      %v706 = vpop.f32.mrf.mxu0
      %v707 = vadd.f32 0.0, %v706
      %v708 = vpop.f32.mrf.mxu0
      %v709 = vadd.f32 0.0, %v708
      %710 = vmatmul.bf16.gmra.mxu0 %v556
      %v711 = vpop.f32.mrf.mxu0
      %v712 = vadd.f32 0.0, %v711
      %v713 = vpop.f32.mrf.mxu0
      %v714 = vadd.f32 0.0, %v713
      %715 = vmatmul.bf16.gmra.mxu0 %v558
      %v716 = vpop.f32.mrf.mxu0
      %v717 = vadd.f32 0.0, %v716
      %v718 = vpop.f32.mrf.mxu0
      %v719 = vadd.f32 0.0, %v718
      %720 = vmatmul.bf16.gmra.mxu0 %v560
      %v721 = vpop.f32.mrf.mxu0
      %v722 = vadd.f32 0.0, %v721
      %v723 = vpop.f32.mrf.mxu0
      %v724 = vadd.f32 0.0, %v723
      %725 = vmatmul.bf16.gmra.mxu0 %v562
      %v726 = vpop.f32.mrf.mxu0
      %v727 = vadd.f32 0.0, %v726
      %v728 = vpop.f32.mrf.mxu0
      %v729 = vadd.f32 0.0, %v728
      %730 = vmatmul.bf16.gmra.mxu0 %v564
      %v731 = vpop.f32.mrf.mxu0
      %v732 = vadd.f32 0.0, %v731
      %v733 = vpop.f32.mrf.mxu0
      %v734 = vadd.f32 0.0, %v733
      %735 = vmatmul.bf16.gmra.mxu0 %v566
      %v736 = vpop.f32.mrf.mxu0
      %v737 = vadd.f32 0.0, %v736
      %v738 = vpop.f32.mrf.mxu0
      %v739 = vadd.f32 0.0, %v738
      %740 = vmatmul.bf16.gmra.mxu0 %v568
      %v741 = vpop.f32.mrf.mxu0
      %v742 = vadd.f32 0.0, %v741
      %v743 = vpop.f32.mrf.mxu0
      %v744 = vadd.f32 0.0, %v743
      %745 = vmatmul.bf16.gmra.mxu0 %v570
      %v746 = vpop.f32.mrf.mxu0
      %v747 = vadd.f32 0.0, %v746
      %v748 = vpop.f32.mrf.mxu0
      %v749 = vadd.f32 0.0, %v748
      %750 = vmatmul.bf16.gmra.mxu0 %v572
      %v751 = vpop.f32.mrf.mxu0
      %v752 = vadd.f32 0.0, %v751
      %v753 = vpop.f32.mrf.mxu0
      %v754 = vadd.f32 0.0, %v753
      %755 = vmatmul.bf16.gmra.mxu0 %v574
      %v756 = vpop.f32.mrf.mxu0
      %v757 = vadd.f32 0.0, %v756
      %v758 = vpop.f32.mrf.mxu0
      %v759 = vadd.f32 0.0, %v758
      %760 = vdwg.mxu0
      %761 = vmatpush.bf16.msra.mxu0 %v655
      %762 = vmatpush.bf16.msra.mxu0 %v654
      %763 = vmatpush.bf16.msra.mxu0 %v653
      %764 = vmatpush.bf16.msra.mxu0 %v652
      %765 = vmatpush.bf16.msra.mxu0 %v651
      %766 = vmatpush.bf16.msra.mxu0 %v650
      %767 = vmatpush.bf16.msra.mxu0 %v649
      %768 = vmatpush.bf16.msra.mxu0 %v648
      %769 = vmatmul.bf16.gmra.mxu0 %v545
      %v770 = vpop.f32.mrf.mxu0
      %v771 = vadd.f32 %v682, %v770
      %v772 = vpop.f32.mrf.mxu0
      %v773 = vadd.f32 %v684, %v772
      %774 = vmatmul.bf16.gmra.mxu0 %v547
      %v775 = vpop.f32.mrf.mxu0
      %v776 = vadd.f32 %v687, %v775
      %v777 = vpop.f32.mrf.mxu0
      %v778 = vadd.f32 %v689, %v777
      %779 = vmatmul.bf16.gmra.mxu0 %v549
      %v780 = vpop.f32.mrf.mxu0
      %v781 = vadd.f32 %v692, %v780
      %v782 = vpop.f32.mrf.mxu0
      %v783 = vadd.f32 %v694, %v782
      %784 = vmatmul.bf16.gmra.mxu0 %v551
      %v785 = vpop.f32.mrf.mxu0
      %v786 = vadd.f32 %v697, %v785
      %v787 = vpop.f32.mrf.mxu0
      %v788 = vadd.f32 %v699, %v787
      %789 = vmatmul.bf16.gmra.mxu0 %v553
      %v790 = vpop.f32.mrf.mxu0
      %v791 = vadd.f32 %v702, %v790
      %v792 = vpop.f32.mrf.mxu0
      %v793 = vadd.f32 %v704, %v792
      %794 = vmatmul.bf16.gmra.mxu0 %v555
      %v795 = vpop.f32.mrf.mxu0
      %v796 = vadd.f32 %v707, %v795
      %v797 = vpop.f32.mrf.mxu0
      %v798 = vadd.f32 %v709, %v797
      %799 = vmatmul.bf16.gmra.mxu0 %v557
      %v800 = vpop.f32.mrf.mxu0
      %v801 = vadd.f32 %v712, %v800
      %v802 = vpop.f32.mrf.mxu0
      %v803 = vadd.f32 %v714, %v802
      %804 = vmatmul.bf16.gmra.mxu0 %v559
      %v805 = vpop.f32.mrf.mxu0
      %v806 = vadd.f32 %v717, %v805
      %v807 = vpop.f32.mrf.mxu0
      %v808 = vadd.f32 %v719, %v807
      %809 = vmatmul.bf16.gmra.mxu0 %v561
      %v810 = vpop.f32.mrf.mxu0
      %v811 = vadd.f32 %v722, %v810
      %v812 = vpop.f32.mrf.mxu0
      %v813 = vadd.f32 %v724, %v812
      %814 = vmatmul.bf16.gmra.mxu0 %v563
      %v815 = vpop.f32.mrf.mxu0
      %v816 = vadd.f32 %v727, %v815
      %v817 = vpop.f32.mrf.mxu0
      %v818 = vadd.f32 %v729, %v817
      %819 = vmatmul.bf16.gmra.mxu0 %v565
      %v820 = vpop.f32.mrf.mxu0
      %v821 = vadd.f32 %v732, %v820
      %v822 = vpop.f32.mrf.mxu0
      %v823 = vadd.f32 %v734, %v822
      %824 = vmatmul.bf16.gmra.mxu0 %v567
      %v825 = vpop.f32.mrf.mxu0
      %v826 = vadd.f32 %v737, %v825
      %v827 = vpop.f32.mrf.mxu0
      %v828 = vadd.f32 %v739, %v827
      %829 = vmatmul.bf16.gmra.mxu0 %v569
      %v830 = vpop.f32.mrf.mxu0
      %v831 = vadd.f32 %v742, %v830
      %v832 = vpop.f32.mrf.mxu0
      %v833 = vadd.f32 %v744, %v832
      %834 = vmatmul.bf16.gmra.mxu0 %v571
      %v835 = vpop.f32.mrf.mxu0
      %v836 = vadd.f32 %v747, %v835
      %v837 = vpop.f32.mrf.mxu0
      %v838 = vadd.f32 %v749, %v837
      %839 = vmatmul.bf16.gmra.mxu0 %v573
      %v840 = vpop.f32.mrf.mxu0
      %v841 = vadd.f32 %v752, %v840
      %v842 = vpop.f32.mrf.mxu0
      %v843 = vadd.f32 %v754, %v842
      %844 = vmatmul.bf16.gmra.mxu0 %v575
      %v845 = vpop.f32.mrf.mxu0
      %v846 = vadd.f32 %v757, %v845
      %v847 = vpop.f32.mrf.mxu0
      %v848 = vadd.f32 %v759, %v847
      %849 = vdwg.mxu0
      // Predicated region
      $region77: #{gcn_forward_fused.1} parent=31 // pred_check
        %p850 = pneg %p233
      $region78: #{gcn_forward_fused.1} parent=31 // pred_check_branch
        %852 = sbr.rel (%p850) target = $region80
      $region79: #{gcn_forward_fused.1} parent=31 // pred_region
        %853 = vst [vmem:[#allocation3] sm:$0xff] %v771
        %854 = vst [vmem:[#allocation3 + $0x8] sm:$0xff] %v773
        %855 = vst [vmem:[#allocation3 + $0x10] sm:$0xff] %v776
        %856 = vst [vmem:[#allocation3 + $0x18] sm:$0xff] %v778
        %857 = vst [vmem:[#allocation3 + $0x20] sm:$0xff] %v781
        %858 = vst [vmem:[#allocation3 + $0x28] sm:$0xff] %v783
        %859 = vst [vmem:[#allocation3 + $0x30] sm:$0xff] %v786
        %860 = vst [vmem:[#allocation3 + $0x38] sm:$0xff] %v788
        %861 = vst [vmem:[#allocation3 + $0x40] sm:$0xff] %v791
        %862 = vst [vmem:[#allocation3 + $0x48] sm:$0xff] %v793
        %863 = vst [vmem:[#allocation3 + $0x50] sm:$0xff] %v796
        %864 = vst [vmem:[#allocation3 + $0x58] sm:$0xff] %v798
        %865 = vst [vmem:[#allocation3 + $0x60] sm:$0xff] %v801
        %866 = vst [vmem:[#allocation3 + $0x68] sm:$0xff] %v803
        %867 = vst [vmem:[#allocation3 + $0x70] sm:$0xff] %v806
        %868 = vst [vmem:[#allocation3 + $0x78] sm:$0xff] %v808
        %869 = vst [vmem:[#allocation3 + $0x80] sm:$0xff] %v811
        %870 = vst [vmem:[#allocation3 + $0x88] sm:$0xff] %v813
        %871 = vst [vmem:[#allocation3 + $0x90] sm:$0xff] %v816
        %872 = vst [vmem:[#allocation3 + $0x98] sm:$0xff] %v818
        %873 = vst [vmem:[#allocation3 + $0xa0] sm:$0xff] %v821
        %874 = vst [vmem:[#allocation3 + $0xa8] sm:$0xff] %v823
        %875 = vst [vmem:[#allocation3 + $0xb0] sm:$0xff] %v826
        %876 = vst [vmem:[#allocation3 + $0xb8] sm:$0xff] %v828
        %877 = vst [vmem:[#allocation3 + $0xc0] sm:$0xff] %v831
        %878 = vst [vmem:[#allocation3 + $0xc8] sm:$0xff] %v833
        %879 = vst [vmem:[#allocation3 + $0xd0] sm:$0xff] %v836
        %880 = vst [vmem:[#allocation3 + $0xd8] sm:$0xff] %v838
        %881 = vst [vmem:[#allocation3 + $0xe0] sm:$0xff] %v841
        %882 = vst [vmem:[#allocation3 + $0xe8] sm:$0xff] %v843
        %883 = vst [vmem:[#allocation3 + $0xf0] sm:$0xff] %v846
        %884 = vst [vmem:[#allocation3 + $0xf8] sm:$0xff] %v848
      $region80: #{gcn_forward_fused.1} parent=31 // pred_fallthru
        _
      %p885 = scmp.gt.s32.totalorder %s23, 0
      // Predicated region
      $region81: #{gcn_forward_fused.1} parent=31 // pred_check
        %p886 = pneg %p885
      $region82: #{gcn_forward_fused.1} parent=31 // pred_check_branch
        %888 = sbr.rel (%p886) target = $region84
      $region83: #{gcn_forward_fused.1} parent=31 // pred_region
        %v889 = vld [vmem:[#allocation3] sm:$0xff]
        %v890 = vld [vmem:[#allocation3 + $0x8] sm:$0xff]
        %v891 = vld [vmem:[#allocation3 + $0x10] sm:$0xff]
        %v892 = vld [vmem:[#allocation3 + $0x18] sm:$0xff]
        %v893 = vld [vmem:[#allocation3 + $0x20] sm:$0xff]
        %v894 = vld [vmem:[#allocation3 + $0x28] sm:$0xff]
        %v895 = vld [vmem:[#allocation3 + $0x30] sm:$0xff]
        %v896 = vld [vmem:[#allocation3 + $0x38] sm:$0xff]
        %v897 = vld [vmem:[#allocation3 + $0x40] sm:$0xff]
        %v898 = vld [vmem:[#allocation3 + $0x48] sm:$0xff]
        %v899 = vld [vmem:[#allocation3 + $0x50] sm:$0xff]
        %v900 = vld [vmem:[#allocation3 + $0x58] sm:$0xff]
        %v901 = vld [vmem:[#allocation3 + $0x60] sm:$0xff]
        %v902 = vld [vmem:[#allocation3 + $0x68] sm:$0xff]
        %v903 = vld [vmem:[#allocation3 + $0x70] sm:$0xff]
        %v904 = vld [vmem:[#allocation3 + $0x78] sm:$0xff]
        %v905 = vld [vmem:[#allocation3 + $0x80] sm:$0xff]
        %v906 = vld [vmem:[#allocation3 + $0x88] sm:$0xff]
        %v907 = vld [vmem:[#allocation3 + $0x90] sm:$0xff]
        %v908 = vld [vmem:[#allocation3 + $0x98] sm:$0xff]
        %v909 = vld [vmem:[#allocation3 + $0xa0] sm:$0xff]
        %v910 = vld [vmem:[#allocation3 + $0xa8] sm:$0xff]
        %v911 = vld [vmem:[#allocation3 + $0xb0] sm:$0xff]
        %v912 = vld [vmem:[#allocation3 + $0xb8] sm:$0xff]
        %v913 = vld [vmem:[#allocation3 + $0xc0] sm:$0xff]
        %v914 = vld [vmem:[#allocation3 + $0xc8] sm:$0xff]
        %v915 = vld [vmem:[#allocation3 + $0xd0] sm:$0xff]
        %v916 = vld [vmem:[#allocation3 + $0xd8] sm:$0xff]
        %v917 = vld [vmem:[#allocation3 + $0xe0] sm:$0xff]
        %v918 = vld [vmem:[#allocation3 + $0xe8] sm:$0xff]
        %v919 = vld [vmem:[#allocation3 + $0xf0] sm:$0xff]
        %v920 = vld [vmem:[#allocation3 + $0xf8] sm:$0xff]
        %v921 = vadd.f32 %v889, %v771
        %v922 = vadd.f32 %v890, %v773
        %v923 = vadd.f32 %v891, %v776
        %v924 = vadd.f32 %v892, %v778
        %v925 = vadd.f32 %v893, %v781
        %v926 = vadd.f32 %v894, %v783
        %v927 = vadd.f32 %v895, %v786
        %v928 = vadd.f32 %v896, %v788
        %v929 = vadd.f32 %v897, %v791
        %v930 = vadd.f32 %v898, %v793
        %v931 = vadd.f32 %v899, %v796
        %v932 = vadd.f32 %v900, %v798
        %v933 = vadd.f32 %v901, %v801
        %v934 = vadd.f32 %v902, %v803
        %v935 = vadd.f32 %v903, %v806
        %v936 = vadd.f32 %v904, %v808
        %v937 = vadd.f32 %v905, %v811
        %v938 = vadd.f32 %v906, %v813
        %v939 = vadd.f32 %v907, %v816
        %v940 = vadd.f32 %v908, %v818
        %v941 = vadd.f32 %v909, %v821
        %v942 = vadd.f32 %v910, %v823
        %v943 = vadd.f32 %v911, %v826
        %v944 = vadd.f32 %v912, %v828
        %v945 = vadd.f32 %v913, %v831
        %v946 = vadd.f32 %v914, %v833
        %v947 = vadd.f32 %v915, %v836
        %v948 = vadd.f32 %v916, %v838
        %v949 = vadd.f32 %v917, %v841
        %v950 = vadd.f32 %v918, %v843
        %v951 = vadd.f32 %v919, %v846
        %v952 = vadd.f32 %v920, %v848
        %953 = vst [vmem:[#allocation3] sm:$0xff] %v921
        %954 = vst [vmem:[#allocation3 + $0x8] sm:$0xff] %v922
        %955 = vst [vmem:[#allocation3 + $0x10] sm:$0xff] %v923
        %956 = vst [vmem:[#allocation3 + $0x18] sm:$0xff] %v924
        %957 = vst [vmem:[#allocation3 + $0x20] sm:$0xff] %v925
        %958 = vst [vmem:[#allocation3 + $0x28] sm:$0xff] %v926
        %959 = vst [vmem:[#allocation3 + $0x30] sm:$0xff] %v927
        %960 = vst [vmem:[#allocation3 + $0x38] sm:$0xff] %v928
        %961 = vst [vmem:[#allocation3 + $0x40] sm:$0xff] %v929
        %962 = vst [vmem:[#allocation3 + $0x48] sm:$0xff] %v930
        %963 = vst [vmem:[#allocation3 + $0x50] sm:$0xff] %v931
        %964 = vst [vmem:[#allocation3 + $0x58] sm:$0xff] %v932
        %965 = vst [vmem:[#allocation3 + $0x60] sm:$0xff] %v933
        %966 = vst [vmem:[#allocation3 + $0x68] sm:$0xff] %v934
        %967 = vst [vmem:[#allocation3 + $0x70] sm:$0xff] %v935
        %968 = vst [vmem:[#allocation3 + $0x78] sm:$0xff] %v936
        %969 = vst [vmem:[#allocation3 + $0x80] sm:$0xff] %v937
        %970 = vst [vmem:[#allocation3 + $0x88] sm:$0xff] %v938
        %971 = vst [vmem:[#allocation3 + $0x90] sm:$0xff] %v939
        %972 = vst [vmem:[#allocation3 + $0x98] sm:$0xff] %v940
        %973 = vst [vmem:[#allocation3 + $0xa0] sm:$0xff] %v941
        %974 = vst [vmem:[#allocation3 + $0xa8] sm:$0xff] %v942
        %975 = vst [vmem:[#allocation3 + $0xb0] sm:$0xff] %v943
        %976 = vst [vmem:[#allocation3 + $0xb8] sm:$0xff] %v944
        %977 = vst [vmem:[#allocation3 + $0xc0] sm:$0xff] %v945
        %978 = vst [vmem:[#allocation3 + $0xc8] sm:$0xff] %v946
        %979 = vst [vmem:[#allocation3 + $0xd0] sm:$0xff] %v947
        %980 = vst [vmem:[#allocation3 + $0xd8] sm:$0xff] %v948
        %981 = vst [vmem:[#allocation3 + $0xe0] sm:$0xff] %v949
        %982 = vst [vmem:[#allocation3 + $0xe8] sm:$0xff] %v950
        %983 = vst [vmem:[#allocation3 + $0xf0] sm:$0xff] %v951
        %984 = vst [vmem:[#allocation3 + $0xf8] sm:$0xff] %v952
      $region84: #{gcn_forward_fused.1} parent=31 // pred_fallthru
        _
      // Predicated region
      $region85: #{gcn_forward_fused.1} parent=31 // pred_check
        %p985 = pneg %p233
      $region86: #{gcn_forward_fused.1} parent=31 // pred_check_branch
        %987 = sbr.rel (%p985) target = $region88
      $region87: #{gcn_forward_fused.1} parent=31 // pred_region
        %v988 = vld [vmem:[%s213] sm:$0xff]
        %v989 = vld [vmem:[%s213 + $0x8] sm:$0xff]
        %v990 = vld [vmem:[%s213 + $0x10] sm:$0xff]
        %v991 = vld [vmem:[%s213 + $0x18] sm:$0xff]
        %v992 = vld [vmem:[%s213 + $0x20] sm:$0xff]
        %v993 = vld [vmem:[%s213 + $0x28] sm:$0xff]
        %v994 = vld [vmem:[%s213 + $0x30] sm:$0xff]
        %v995 = vld [vmem:[%s213 + $0x38] sm:$0xff]
        %v996 = vld [vmem:[%s213 + $0x40] sm:$0xff]
        %v997 = vld [vmem:[%s213 + $0x48] sm:$0xff]
        %v998 = vld [vmem:[%s213 + $0x50] sm:$0xff]
        %v999 = vld [vmem:[%s213 + $0x58] sm:$0xff]
        %v1000 = vld [vmem:[%s213 + $0x60] sm:$0xff]
        %v1001 = vld [vmem:[%s213 + $0x68] sm:$0xff]
        %v1002 = vld [vmem:[%s213 + $0x70] sm:$0xff]
        %v1003 = vld [vmem:[%s213 + $0x78] sm:$0xff]
        %v1004 = vld [vmem:[%s213 + $0x80] sm:$0xff]
        %v1005 = vld [vmem:[%s213 + $0x88] sm:$0xff]
        %v1006 = vld [vmem:[%s213 + $0x90] sm:$0xff]
        %v1007 = vld [vmem:[%s213 + $0x98] sm:$0xff]
        %v1008 = vld [vmem:[%s213 + $0xa0] sm:$0xff]
        %v1009 = vld [vmem:[%s213 + $0xa8] sm:$0xff]
        %v1010 = vld [vmem:[%s213 + $0xb0] sm:$0xff]
        %v1011 = vld [vmem:[%s213 + $0xb8] sm:$0xff]
        %v1012 = vld [vmem:[%s213 + $0xc0] sm:$0xff]
        %v1013 = vld [vmem:[%s213 + $0xc8] sm:$0xff]
        %v1014 = vld [vmem:[%s213 + $0xd0] sm:$0xff]
        %v1015 = vld [vmem:[%s213 + $0xd8] sm:$0xff]
        %v1016 = vld [vmem:[%s213 + $0xe0] sm:$0xff]
        %v1017 = vld [vmem:[%s213 + $0xe8] sm:$0xff]
        %v1018 = vld [vmem:[%s213 + $0xf0] sm:$0xff]
        %v1019 = vld [vmem:[%s213 + $0xf8] sm:$0xff]
        %v1020 = vld [vmem:[#allocation3] sm:$0xff]
        %v1021 = vld [vmem:[#allocation3 + $0x8] sm:$0xff]
        %v1022 = vld [vmem:[#allocation3 + $0x10] sm:$0xff]
        %v1023 = vld [vmem:[#allocation3 + $0x18] sm:$0xff]
        %v1024 = vld [vmem:[#allocation3 + $0x20] sm:$0xff]
        %v1025 = vld [vmem:[#allocation3 + $0x28] sm:$0xff]
        %v1026 = vld [vmem:[#allocation3 + $0x30] sm:$0xff]
        %v1027 = vld [vmem:[#allocation3 + $0x38] sm:$0xff]
        %v1028 = vld [vmem:[#allocation3 + $0x40] sm:$0xff]
        %v1029 = vld [vmem:[#allocation3 + $0x48] sm:$0xff]
        %v1030 = vld [vmem:[#allocation3 + $0x50] sm:$0xff]
        %v1031 = vld [vmem:[#allocation3 + $0x58] sm:$0xff]
        %v1032 = vld [vmem:[#allocation3 + $0x60] sm:$0xff]
        %v1033 = vld [vmem:[#allocation3 + $0x68] sm:$0xff]
        %v1034 = vld [vmem:[#allocation3 + $0x70] sm:$0xff]
        %v1035 = vld [vmem:[#allocation3 + $0x78] sm:$0xff]
        %v1036 = vld [vmem:[#allocation3 + $0x80] sm:$0xff]
        %v1037 = vld [vmem:[#allocation3 + $0x88] sm:$0xff]
        %v1038 = vld [vmem:[#allocation3 + $0x90] sm:$0xff]
        %v1039 = vld [vmem:[#allocation3 + $0x98] sm:$0xff]
        %v1040 = vld [vmem:[#allocation3 + $0xa0] sm:$0xff]
        %v1041 = vld [vmem:[#allocation3 + $0xa8] sm:$0xff]
        %v1042 = vld [vmem:[#allocation3 + $0xb0] sm:$0xff]
        %v1043 = vld [vmem:[#allocation3 + $0xb8] sm:$0xff]
        %v1044 = vld [vmem:[#allocation3 + $0xc0] sm:$0xff]
        %v1045 = vld [vmem:[#allocation3 + $0xc8] sm:$0xff]
        %v1046 = vld [vmem:[#allocation3 + $0xd0] sm:$0xff]
        %v1047 = vld [vmem:[#allocation3 + $0xd8] sm:$0xff]
        %v1048 = vld [vmem:[#allocation3 + $0xe0] sm:$0xff]
        %v1049 = vld [vmem:[#allocation3 + $0xe8] sm:$0xff]
        %v1050 = vld [vmem:[#allocation3 + $0xf0] sm:$0xff]
        %v1051 = vld [vmem:[#allocation3 + $0xf8] sm:$0xff]
        %1053 = vset.pattern.permute.xlu0 0
        %1054 = vperm.xlu0 %1053, %v988
        %v1055 = vpop.permute.xlu0 %1054
        %1058 = vset.pattern.permute.xlu0 0
        %1059 = vperm.xlu0 %1058, %v989
        %v1060 = vpop.permute.xlu0 %1059
        %1063 = vset.pattern.permute.xlu0 0
        %1064 = vperm.xlu0 %1063, %v990
        %v1065 = vpop.permute.xlu0 %1064
        %1068 = vset.pattern.permute.xlu0 0
        %1069 = vperm.xlu0 %1068, %v991
        %v1070 = vpop.permute.xlu0 %1069
        %1073 = vset.pattern.permute.xlu0 0
        %1074 = vperm.xlu0 %1073, %v992
        %v1075 = vpop.permute.xlu0 %1074
        %1078 = vset.pattern.permute.xlu0 0
        %1079 = vperm.xlu0 %1078, %v993
        %v1080 = vpop.permute.xlu0 %1079
        %1083 = vset.pattern.permute.xlu0 0
        %1084 = vperm.xlu0 %1083, %v994
        %v1085 = vpop.permute.xlu0 %1084
        %1088 = vset.pattern.permute.xlu0 0
        %1089 = vperm.xlu0 %1088, %v995
        %v1090 = vpop.permute.xlu0 %1089
        %1093 = vset.pattern.permute.xlu0 0
        %1094 = vperm.xlu0 %1093, %v996
        %v1095 = vpop.permute.xlu0 %1094
        %1098 = vset.pattern.permute.xlu0 0
        %1099 = vperm.xlu0 %1098, %v997
        %v1100 = vpop.permute.xlu0 %1099
        %1103 = vset.pattern.permute.xlu0 0
        %1104 = vperm.xlu0 %1103, %v998
        %v1105 = vpop.permute.xlu0 %1104
        %1108 = vset.pattern.permute.xlu0 0
        %1109 = vperm.xlu0 %1108, %v999
        %v1110 = vpop.permute.xlu0 %1109
        %1113 = vset.pattern.permute.xlu0 0
        %1114 = vperm.xlu0 %1113, %v1000
        %v1115 = vpop.permute.xlu0 %1114
        %1118 = vset.pattern.permute.xlu0 0
        %1119 = vperm.xlu0 %1118, %v1001
        %v1120 = vpop.permute.xlu0 %1119
        %1123 = vset.pattern.permute.xlu0 0
        %1124 = vperm.xlu0 %1123, %v1002
        %v1125 = vpop.permute.xlu0 %1124
        %1128 = vset.pattern.permute.xlu0 0
        %1129 = vperm.xlu0 %1128, %v1003
        %v1130 = vpop.permute.xlu0 %1129
        %1133 = vset.pattern.permute.xlu0 0
        %1134 = vperm.xlu0 %1133, %v1004
        %v1135 = vpop.permute.xlu0 %1134
        %1138 = vset.pattern.permute.xlu0 0
        %1139 = vperm.xlu0 %1138, %v1005
        %v1140 = vpop.permute.xlu0 %1139
        %1143 = vset.pattern.permute.xlu0 0
        %1144 = vperm.xlu0 %1143, %v1006
        %v1145 = vpop.permute.xlu0 %1144
        %1148 = vset.pattern.permute.xlu0 0
        %1149 = vperm.xlu0 %1148, %v1007
        %v1150 = vpop.permute.xlu0 %1149
        %1153 = vset.pattern.permute.xlu0 0
        %1154 = vperm.xlu0 %1153, %v1008
        %v1155 = vpop.permute.xlu0 %1154
        %1158 = vset.pattern.permute.xlu0 0
        %1159 = vperm.xlu0 %1158, %v1009
        %v1160 = vpop.permute.xlu0 %1159
        %1163 = vset.pattern.permute.xlu0 0
        %1164 = vperm.xlu0 %1163, %v1010
        %v1165 = vpop.permute.xlu0 %1164
        %1168 = vset.pattern.permute.xlu0 0
        %1169 = vperm.xlu0 %1168, %v1011
        %v1170 = vpop.permute.xlu0 %1169
        %1173 = vset.pattern.permute.xlu0 0
        %1174 = vperm.xlu0 %1173, %v1012
        %v1175 = vpop.permute.xlu0 %1174
        %1178 = vset.pattern.permute.xlu0 0
        %1179 = vperm.xlu0 %1178, %v1013
        %v1180 = vpop.permute.xlu0 %1179
        %1183 = vset.pattern.permute.xlu0 0
        %1184 = vperm.xlu0 %1183, %v1014
        %v1185 = vpop.permute.xlu0 %1184
        %1188 = vset.pattern.permute.xlu0 0
        %1189 = vperm.xlu0 %1188, %v1015
        %v1190 = vpop.permute.xlu0 %1189
        %1193 = vset.pattern.permute.xlu0 0
        %1194 = vperm.xlu0 %1193, %v1016
        %v1195 = vpop.permute.xlu0 %1194
        %1198 = vset.pattern.permute.xlu0 0
        %1199 = vperm.xlu0 %1198, %v1017
        %v1200 = vpop.permute.xlu0 %1199
        %1203 = vset.pattern.permute.xlu0 0
        %1204 = vperm.xlu0 %1203, %v1018
        %v1205 = vpop.permute.xlu0 %1204
        %1208 = vset.pattern.permute.xlu0 0
        %1209 = vperm.xlu0 %1208, %v1019
        %v1210 = vpop.permute.xlu0 %1209
        %v1212 = vmul.f32 %v1020, %v1055
        %v1213 = vmul.f32 %v1021, %v1060
        %v1214 = vmul.f32 %v1022, %v1065
        %v1215 = vmul.f32 %v1023, %v1070
        %v1216 = vmul.f32 %v1024, %v1075
        %v1217 = vmul.f32 %v1025, %v1080
        %v1218 = vmul.f32 %v1026, %v1085
        %v1219 = vmul.f32 %v1027, %v1090
        %v1220 = vmul.f32 %v1028, %v1095
        %v1221 = vmul.f32 %v1029, %v1100
        %v1222 = vmul.f32 %v1030, %v1105
        %v1223 = vmul.f32 %v1031, %v1110
        %v1224 = vmul.f32 %v1032, %v1115
        %v1225 = vmul.f32 %v1033, %v1120
        %v1226 = vmul.f32 %v1034, %v1125
        %v1227 = vmul.f32 %v1035, %v1130
        %v1228 = vmul.f32 %v1036, %v1135
        %v1229 = vmul.f32 %v1037, %v1140
        %v1230 = vmul.f32 %v1038, %v1145
        %v1231 = vmul.f32 %v1039, %v1150
        %v1232 = vmul.f32 %v1040, %v1155
        %v1233 = vmul.f32 %v1041, %v1160
        %v1234 = vmul.f32 %v1042, %v1165
        %v1235 = vmul.f32 %v1043, %v1170
        %v1236 = vmul.f32 %v1044, %v1175
        %v1237 = vmul.f32 %v1045, %v1180
        %v1238 = vmul.f32 %v1046, %v1185
        %v1239 = vmul.f32 %v1047, %v1190
        %v1240 = vmul.f32 %v1048, %v1195
        %v1241 = vmul.f32 %v1049, %v1200
        %v1242 = vmul.f32 %v1050, %v1205
        %v1243 = vmul.f32 %v1051, %v1210
        %v1244 = vld [vmem:[%s219] sm:$0xff]
        %v1245 = vld [vmem:[%s219 + $0x8] sm:$0xff]
        %v1246 = vld [vmem:[%s219 + $0x10] sm:$0xff]
        %v1247 = vld [vmem:[%s219 + $0x18] sm:$0xff]
        %v1248 = vld [vmem:[%s219 + $0x20] sm:$0xff]
        %v1249 = vld [vmem:[%s219 + $0x28] sm:$0xff]
        %v1250 = vld [vmem:[%s219 + $0x30] sm:$0xff]
        %v1251 = vld [vmem:[%s219 + $0x38] sm:$0xff]
        %v1252 = vld [vmem:[%s219 + $0x40] sm:$0xff]
        %v1253 = vld [vmem:[%s219 + $0x48] sm:$0xff]
        %v1254 = vld [vmem:[%s219 + $0x50] sm:$0xff]
        %v1255 = vld [vmem:[%s219 + $0x58] sm:$0xff]
        %v1256 = vld [vmem:[%s219 + $0x60] sm:$0xff]
        %v1257 = vld [vmem:[%s219 + $0x68] sm:$0xff]
        %v1258 = vld [vmem:[%s219 + $0x70] sm:$0xff]
        %v1259 = vld [vmem:[%s219 + $0x78] sm:$0xff]
        %v1260 = vld [vmem:[%s222] sm:$0x1]
        %v1262 = vperm.slane %v1260, 0
        %1264 = vmatpush.msra.mxu0 %v1259
        %1265 = vmatpush.msra.mxu0 %v1258
        %1266 = vmatpush.msra.mxu0 %v1257
        %1267 = vmatpush.msra.mxu0 %v1256
        %1268 = vmatpush.msra.mxu0 %v1255
        %1269 = vmatpush.msra.mxu0 %v1254
        %1270 = vmatpush.msra.mxu0 %v1253
        %1271 = vmatpush.msra.mxu0 %v1252
        %1272 = vmatpush.msra.mxu0 %v1251
        %1273 = vmatpush.msra.mxu0 %v1250
        %1274 = vmatpush.msra.mxu0 %v1249
        %1275 = vmatpush.msra.mxu0 %v1248
        %1276 = vmatpush.msra.mxu0 %v1247
        %1277 = vmatpush.msra.mxu0 %v1246
        %1278 = vmatpush.msra.mxu0 %v1245
        %1279 = vmatpush.msra.mxu0 %v1244
        %1280 = vmatmul.f32.gmra.mxu0 %v1212
        %v1281 = vpop.f32.mrf.mxu0
        %v1282 = vadd.f32 %v1262, %v1281
        %1283 = vmatmul.f32.gmra.mxu0 %v1213
        %v1284 = vpop.f32.mrf.mxu0
        %v1285 = vadd.f32 %v1262, %v1284
        %1286 = vmatmul.f32.gmra.mxu0 %v1214
        %v1287 = vpop.f32.mrf.mxu0
        %v1288 = vadd.f32 %v1262, %v1287
        %1289 = vmatmul.f32.gmra.mxu0 %v1215
        %v1290 = vpop.f32.mrf.mxu0
        %v1291 = vadd.f32 %v1262, %v1290
        %1292 = vmatmul.f32.gmra.mxu0 %v1216
        %v1293 = vpop.f32.mrf.mxu0
        %v1294 = vadd.f32 %v1262, %v1293
        %1295 = vmatmul.f32.gmra.mxu0 %v1217
        %v1296 = vpop.f32.mrf.mxu0
        %v1297 = vadd.f32 %v1262, %v1296
        %1298 = vmatmul.f32.gmra.mxu0 %v1218
        %v1299 = vpop.f32.mrf.mxu0
        %v1300 = vadd.f32 %v1262, %v1299
        %1301 = vmatmul.f32.gmra.mxu0 %v1219
        %v1302 = vpop.f32.mrf.mxu0
        %v1303 = vadd.f32 %v1262, %v1302
        %1304 = vmatmul.f32.gmra.mxu0 %v1220
        %v1305 = vpop.f32.mrf.mxu0
        %v1306 = vadd.f32 %v1262, %v1305
        %1307 = vmatmul.f32.gmra.mxu0 %v1221
        %v1308 = vpop.f32.mrf.mxu0
        %v1309 = vadd.f32 %v1262, %v1308
        %1310 = vmatmul.f32.gmra.mxu0 %v1222
        %v1311 = vpop.f32.mrf.mxu0
        %v1312 = vadd.f32 %v1262, %v1311
        %1313 = vmatmul.f32.gmra.mxu0 %v1223
        %v1314 = vpop.f32.mrf.mxu0
        %v1315 = vadd.f32 %v1262, %v1314
        %1316 = vmatmul.f32.gmra.mxu0 %v1224
        %v1317 = vpop.f32.mrf.mxu0
        %v1318 = vadd.f32 %v1262, %v1317
        %1319 = vmatmul.f32.gmra.mxu0 %v1225
        %v1320 = vpop.f32.mrf.mxu0
        %v1321 = vadd.f32 %v1262, %v1320
        %1322 = vmatmul.f32.gmra.mxu0 %v1226
        %v1323 = vpop.f32.mrf.mxu0
        %v1324 = vadd.f32 %v1262, %v1323
        %1325 = vmatmul.f32.gmra.mxu0 %v1227
        %v1326 = vpop.f32.mrf.mxu0
        %v1327 = vadd.f32 %v1262, %v1326
        %1328 = vmatmul.f32.gmra.mxu0 %v1228
        %v1329 = vpop.f32.mrf.mxu0
        %v1330 = vadd.f32 %v1262, %v1329
        %1331 = vmatmul.f32.gmra.mxu0 %v1229
        %v1332 = vpop.f32.mrf.mxu0
        %v1333 = vadd.f32 %v1262, %v1332
        %1334 = vmatmul.f32.gmra.mxu0 %v1230
        %v1335 = vpop.f32.mrf.mxu0
        %v1336 = vadd.f32 %v1262, %v1335
        %1337 = vmatmul.f32.gmra.mxu0 %v1231
        %v1338 = vpop.f32.mrf.mxu0
        %v1339 = vadd.f32 %v1262, %v1338
        %1340 = vmatmul.f32.gmra.mxu0 %v1232
        %v1341 = vpop.f32.mrf.mxu0
        %v1342 = vadd.f32 %v1262, %v1341
        %1343 = vmatmul.f32.gmra.mxu0 %v1233
        %v1344 = vpop.f32.mrf.mxu0
        %v1345 = vadd.f32 %v1262, %v1344
        %1346 = vmatmul.f32.gmra.mxu0 %v1234
        %v1347 = vpop.f32.mrf.mxu0
        %v1348 = vadd.f32 %v1262, %v1347
        %1349 = vmatmul.f32.gmra.mxu0 %v1235
        %v1350 = vpop.f32.mrf.mxu0
        %v1351 = vadd.f32 %v1262, %v1350
        %1352 = vmatmul.f32.gmra.mxu0 %v1236
        %v1353 = vpop.f32.mrf.mxu0
        %v1354 = vadd.f32 %v1262, %v1353
        %1355 = vmatmul.f32.gmra.mxu0 %v1237
        %v1356 = vpop.f32.mrf.mxu0
        %v1357 = vadd.f32 %v1262, %v1356
        %1358 = vmatmul.f32.gmra.mxu0 %v1238
        %v1359 = vpop.f32.mrf.mxu0
        %v1360 = vadd.f32 %v1262, %v1359
        %1361 = vmatmul.f32.gmra.mxu0 %v1239
        %v1362 = vpop.f32.mrf.mxu0
        %v1363 = vadd.f32 %v1262, %v1362
        %1364 = vmatmul.f32.gmra.mxu0 %v1240
        %v1365 = vpop.f32.mrf.mxu0
        %v1366 = vadd.f32 %v1262, %v1365
        %1367 = vmatmul.f32.gmra.mxu0 %v1241
        %v1368 = vpop.f32.mrf.mxu0
        %v1369 = vadd.f32 %v1262, %v1368
        %1370 = vmatmul.f32.gmra.mxu0 %v1242
        %v1371 = vpop.f32.mrf.mxu0
        %v1372 = vadd.f32 %v1262, %v1371
        %1373 = vmatmul.f32.gmra.mxu0 %v1243
        %v1374 = vpop.f32.mrf.mxu0
        %v1375 = vadd.f32 %v1262, %v1374
        %1376 = vdwg.mxu0
        %s1377 = sadd.s32 %s21, 1
        %p1378 = scmp.lt.s32.totalorder %s1377, 2
        %s1379 = scalar_select %p1378, 0.01, 1.0
        %vm1380 = vcmp.ge.f32.partialorder %v1282, 0.0
        %vm1381 = vcmp.ge.f32.partialorder %v1285, 0.0
        %vm1382 = vcmp.ge.f32.partialorder %v1288, 0.0
        %vm1383 = vcmp.ge.f32.partialorder %v1291, 0.0
        %vm1384 = vcmp.ge.f32.partialorder %v1294, 0.0
        %vm1385 = vcmp.ge.f32.partialorder %v1297, 0.0
        %vm1386 = vcmp.ge.f32.partialorder %v1300, 0.0
        %vm1387 = vcmp.ge.f32.partialorder %v1303, 0.0
        %vm1388 = vcmp.ge.f32.partialorder %v1306, 0.0
        %vm1389 = vcmp.ge.f32.partialorder %v1309, 0.0
        %vm1390 = vcmp.ge.f32.partialorder %v1312, 0.0
        %vm1391 = vcmp.ge.f32.partialorder %v1315, 0.0
        %vm1392 = vcmp.ge.f32.partialorder %v1318, 0.0
        %vm1393 = vcmp.ge.f32.partialorder %v1321, 0.0
        %vm1394 = vcmp.ge.f32.partialorder %v1324, 0.0
        %vm1395 = vcmp.ge.f32.partialorder %v1327, 0.0
        %vm1396 = vcmp.ge.f32.partialorder %v1330, 0.0
        %vm1397 = vcmp.ge.f32.partialorder %v1333, 0.0
        %vm1398 = vcmp.ge.f32.partialorder %v1336, 0.0
        %vm1399 = vcmp.ge.f32.partialorder %v1339, 0.0
        %vm1400 = vcmp.ge.f32.partialorder %v1342, 0.0
        %vm1401 = vcmp.ge.f32.partialorder %v1345, 0.0
        %vm1402 = vcmp.ge.f32.partialorder %v1348, 0.0
        %vm1403 = vcmp.ge.f32.partialorder %v1351, 0.0
        %vm1404 = vcmp.ge.f32.partialorder %v1354, 0.0
        %vm1405 = vcmp.ge.f32.partialorder %v1357, 0.0
        %vm1406 = vcmp.ge.f32.partialorder %v1360, 0.0
        %vm1407 = vcmp.ge.f32.partialorder %v1363, 0.0
        %vm1408 = vcmp.ge.f32.partialorder %v1366, 0.0
        %vm1409 = vcmp.ge.f32.partialorder %v1369, 0.0
        %vm1410 = vcmp.ge.f32.partialorder %v1372, 0.0
        %vm1411 = vcmp.ge.f32.partialorder %v1375, 0.0
        %v1412 = vstv %s1379
        %v1413 = vmul.f32 %v1412, %v1282
        %v1414 = vmul.f32 %v1412, %v1285
        %v1415 = vmul.f32 %v1412, %v1288
        %v1416 = vmul.f32 %v1412, %v1291
        %v1417 = vmul.f32 %v1412, %v1294
        %v1418 = vmul.f32 %v1412, %v1297
        %v1419 = vmul.f32 %v1412, %v1300
        %v1420 = vmul.f32 %v1412, %v1303
        %v1421 = vmul.f32 %v1412, %v1306
        %v1422 = vmul.f32 %v1412, %v1309
        %v1423 = vmul.f32 %v1412, %v1312
        %v1424 = vmul.f32 %v1412, %v1315
        %v1425 = vmul.f32 %v1412, %v1318
        %v1426 = vmul.f32 %v1412, %v1321
        %v1427 = vmul.f32 %v1412, %v1324
        %v1428 = vmul.f32 %v1412, %v1327
        %v1429 = vmul.f32 %v1412, %v1330
        %v1430 = vmul.f32 %v1412, %v1333
        %v1431 = vmul.f32 %v1412, %v1336
        %v1432 = vmul.f32 %v1412, %v1339
        %v1433 = vmul.f32 %v1412, %v1342
        %v1434 = vmul.f32 %v1412, %v1345
        %v1435 = vmul.f32 %v1412, %v1348
        %v1436 = vmul.f32 %v1412, %v1351
        %v1437 = vmul.f32 %v1412, %v1354
        %v1438 = vmul.f32 %v1412, %v1357
        %v1439 = vmul.f32 %v1412, %v1360
        %v1440 = vmul.f32 %v1412, %v1363
        %v1441 = vmul.f32 %v1412, %v1366
        %v1442 = vmul.f32 %v1412, %v1369
        %v1443 = vmul.f32 %v1412, %v1372
        %v1444 = vmul.f32 %v1412, %v1375
        %v1445 = vsel %vm1380, %v1282, %v1413
        %v1446 = vsel %vm1381, %v1285, %v1414
        %v1447 = vsel %vm1382, %v1288, %v1415
        %v1448 = vsel %vm1383, %v1291, %v1416
        %v1449 = vsel %vm1384, %v1294, %v1417
        %v1450 = vsel %vm1385, %v1297, %v1418
        %v1451 = vsel %vm1386, %v1300, %v1419
        %v1452 = vsel %vm1387, %v1303, %v1420
        %v1453 = vsel %vm1388, %v1306, %v1421
        %v1454 = vsel %vm1389, %v1309, %v1422
        %v1455 = vsel %vm1390, %v1312, %v1423
        %v1456 = vsel %vm1391, %v1315, %v1424
        %v1457 = vsel %vm1392, %v1318, %v1425
        %v1458 = vsel %vm1393, %v1321, %v1426
        %v1459 = vsel %vm1394, %v1324, %v1427
        %v1460 = vsel %vm1395, %v1327, %v1428
        %v1461 = vsel %vm1396, %v1330, %v1429
        %v1462 = vsel %vm1397, %v1333, %v1430
        %v1463 = vsel %vm1398, %v1336, %v1431
        %v1464 = vsel %vm1399, %v1339, %v1432
        %v1465 = vsel %vm1400, %v1342, %v1433
        %v1466 = vsel %vm1401, %v1345, %v1434
        %v1467 = vsel %vm1402, %v1348, %v1435
        %v1468 = vsel %vm1403, %v1351, %v1436
        %v1469 = vsel %vm1404, %v1354, %v1437
        %v1470 = vsel %vm1405, %v1357, %v1438
        %v1471 = vsel %vm1406, %v1360, %v1439
        %v1472 = vsel %vm1407, %v1363, %v1440
        %v1473 = vsel %vm1408, %v1366, %v1441
        %v1474 = vsel %vm1409, %v1369, %v1442
        %v1475 = vsel %vm1410, %v1372, %v1443
        %v1476 = vsel %vm1411, %v1375, %v1444
        %v1477 = vpack.c.bf16 %v1445, %v1445
        %v1478 = vpack.c.bf16 %v1446, %v1446
        %v1479 = vpack.c.bf16 %v1447, %v1447
        %v1480 = vpack.c.bf16 %v1448, %v1448
        %v1481 = vpack.c.bf16 %v1449, %v1449
        %v1482 = vpack.c.bf16 %v1450, %v1450
        %v1483 = vpack.c.bf16 %v1451, %v1451
        %v1484 = vpack.c.bf16 %v1452, %v1452
        %v1485 = vpack.c.bf16 %v1453, %v1453
        %v1486 = vpack.c.bf16 %v1454, %v1454
        %v1487 = vpack.c.bf16 %v1455, %v1455
        %v1488 = vpack.c.bf16 %v1456, %v1456
        %v1489 = vpack.c.bf16 %v1457, %v1457
        %v1490 = vpack.c.bf16 %v1458, %v1458
        %v1491 = vpack.c.bf16 %v1459, %v1459
        %v1492 = vpack.c.bf16 %v1460, %v1460
        %v1493 = vpack.c.bf16 %v1461, %v1461
        %v1494 = vpack.c.bf16 %v1462, %v1462
        %v1495 = vpack.c.bf16 %v1463, %v1463
        %v1496 = vpack.c.bf16 %v1464, %v1464
        %v1497 = vpack.c.bf16 %v1465, %v1465
        %v1498 = vpack.c.bf16 %v1466, %v1466
        %v1499 = vpack.c.bf16 %v1467, %v1467
        %v1500 = vpack.c.bf16 %v1468, %v1468
        %v1501 = vpack.c.bf16 %v1469, %v1469
        %v1502 = vpack.c.bf16 %v1470, %v1470
        %v1503 = vpack.c.bf16 %v1471, %v1471
        %v1504 = vpack.c.bf16 %v1472, %v1472
        %v1505 = vpack.c.bf16 %v1473, %v1473
        %v1506 = vpack.c.bf16 %v1474, %v1474
        %v1507 = vpack.c.bf16 %v1475, %v1475
        %v1508 = vpack.c.bf16 %v1476, %v1476
        %1509 = vst [vmem:[%s227] sm:$0xf] %v1477
        %1510 = vst [vmem:[%s227 + $0x4] sm:$0xf] %v1478
        %1511 = vst [vmem:[%s227 + $0x8] sm:$0xf] %v1479
        %1512 = vst [vmem:[%s227 + $0xc] sm:$0xf] %v1480
        %1513 = vst [vmem:[%s227 + $0x10] sm:$0xf] %v1481
        %1514 = vst [vmem:[%s227 + $0x14] sm:$0xf] %v1482
        %1515 = vst [vmem:[%s227 + $0x18] sm:$0xf] %v1483
        %1516 = vst [vmem:[%s227 + $0x1c] sm:$0xf] %v1484
        %1517 = vst [vmem:[%s227 + $0x20] sm:$0xf] %v1485
        %1518 = vst [vmem:[%s227 + $0x24] sm:$0xf] %v1486
        %1519 = vst [vmem:[%s227 + $0x28] sm:$0xf] %v1487
        %1520 = vst [vmem:[%s227 + $0x2c] sm:$0xf] %v1488
        %1521 = vst [vmem:[%s227 + $0x30] sm:$0xf] %v1489
        %1522 = vst [vmem:[%s227 + $0x34] sm:$0xf] %v1490
        %1523 = vst [vmem:[%s227 + $0x38] sm:$0xf] %v1491
        %1524 = vst [vmem:[%s227 + $0x3c] sm:$0xf] %v1492
        %1525 = vst [vmem:[%s227 + $0x40] sm:$0xf] %v1493
        %1526 = vst [vmem:[%s227 + $0x44] sm:$0xf] %v1494
        %1527 = vst [vmem:[%s227 + $0x48] sm:$0xf] %v1495
        %1528 = vst [vmem:[%s227 + $0x4c] sm:$0xf] %v1496
        %1529 = vst [vmem:[%s227 + $0x50] sm:$0xf] %v1497
        %1530 = vst [vmem:[%s227 + $0x54] sm:$0xf] %v1498
        %1531 = vst [vmem:[%s227 + $0x58] sm:$0xf] %v1499
        %1532 = vst [vmem:[%s227 + $0x5c] sm:$0xf] %v1500
        %1533 = vst [vmem:[%s227 + $0x60] sm:$0xf] %v1501
        %1534 = vst [vmem:[%s227 + $0x64] sm:$0xf] %v1502
        %1535 = vst [vmem:[%s227 + $0x68] sm:$0xf] %v1503
        %1536 = vst [vmem:[%s227 + $0x6c] sm:$0xf] %v1504
        %1537 = vst [vmem:[%s227 + $0x70] sm:$0xf] %v1505
        %1538 = vst [vmem:[%s227 + $0x74] sm:$0xf] %v1506
        %1539 = vst [vmem:[%s227 + $0x78] sm:$0xf] %v1507
        %1540 = vst [vmem:[%s227 + $0x7c] sm:$0xf] %v1508
        // Predicated region
        $region89: #{gcn_forward_fused.1} parent=87 // pred_check
          %p1541 = pneg %p1378
        $region90: #{gcn_forward_fused.1} parent=87 // pred_check_branch
          %1543 = sbr.rel (%p1541) target = $region92
        $region91: #{gcn_forward_fused.1} parent=87 // pred_region
          %s1544 = smul.u32 %s22, 256
          %v1545 = vmul.f32 %v1445, %v1055
          %v1546 = vmul.f32 %v1446, %v1060
          %v1547 = vmul.f32 %v1447, %v1065
          %v1548 = vmul.f32 %v1448, %v1070
          %v1549 = vmul.f32 %v1449, %v1075
          %v1550 = vmul.f32 %v1450, %v1080
          %v1551 = vmul.f32 %v1451, %v1085
          %v1552 = vmul.f32 %v1452, %v1090
          %v1553 = vmul.f32 %v1453, %v1095
          %v1554 = vmul.f32 %v1454, %v1100
          %v1555 = vmul.f32 %v1455, %v1105
          %v1556 = vmul.f32 %v1456, %v1110
          %v1557 = vmul.f32 %v1457, %v1115
          %v1558 = vmul.f32 %v1458, %v1120
          %v1559 = vmul.f32 %v1459, %v1125
          %v1560 = vmul.f32 %v1460, %v1130
          %v1561 = vmul.f32 %v1461, %v1135
          %v1562 = vmul.f32 %v1462, %v1140
          %v1563 = vmul.f32 %v1463, %v1145
          %v1564 = vmul.f32 %v1464, %v1150
          %v1565 = vmul.f32 %v1465, %v1155
          %v1566 = vmul.f32 %v1466, %v1160
          %v1567 = vmul.f32 %v1467, %v1165
          %v1568 = vmul.f32 %v1468, %v1170
          %v1569 = vmul.f32 %v1469, %v1175
          %v1570 = vmul.f32 %v1470, %v1180
          %v1571 = vmul.f32 %v1471, %v1185
          %v1572 = vmul.f32 %v1472, %v1190
          %v1573 = vmul.f32 %v1473, %v1195
          %v1574 = vmul.f32 %v1474, %v1200
          %v1575 = vmul.f32 %v1475, %v1205
          %v1576 = vmul.f32 %v1476, %v1210
          %v1577 = vpack.c.bf16 %v1545, %v1545
          %v1578 = vpack.c.bf16 %v1546, %v1546
          %v1579 = vpack.c.bf16 %v1547, %v1547
          %v1580 = vpack.c.bf16 %v1548, %v1548
          %v1581 = vpack.c.bf16 %v1549, %v1549
          %v1582 = vpack.c.bf16 %v1550, %v1550
          %v1583 = vpack.c.bf16 %v1551, %v1551
          %v1584 = vpack.c.bf16 %v1552, %v1552
          %v1585 = vpack.c.bf16 %v1553, %v1553
          %v1586 = vpack.c.bf16 %v1554, %v1554
          %v1587 = vpack.c.bf16 %v1555, %v1555
          %v1588 = vpack.c.bf16 %v1556, %v1556
          %v1589 = vpack.c.bf16 %v1557, %v1557
          %v1590 = vpack.c.bf16 %v1558, %v1558
          %v1591 = vpack.c.bf16 %v1559, %v1559
          %v1592 = vpack.c.bf16 %v1560, %v1560
          %v1593 = vpack.c.bf16 %v1561, %v1561
          %v1594 = vpack.c.bf16 %v1562, %v1562
          %v1595 = vpack.c.bf16 %v1563, %v1563
          %v1596 = vpack.c.bf16 %v1564, %v1564
          %v1597 = vpack.c.bf16 %v1565, %v1565
          %v1598 = vpack.c.bf16 %v1566, %v1566
          %v1599 = vpack.c.bf16 %v1567, %v1567
          %v1600 = vpack.c.bf16 %v1568, %v1568
          %v1601 = vpack.c.bf16 %v1569, %v1569
          %v1602 = vpack.c.bf16 %v1570, %v1570
          %v1603 = vpack.c.bf16 %v1571, %v1571
          %v1604 = vpack.c.bf16 %v1572, %v1572
          %v1605 = vpack.c.bf16 %v1573, %v1573
          %v1606 = vpack.c.bf16 %v1574, %v1574
          %v1607 = vpack.c.bf16 %v1575, %v1575
          %v1608 = vpack.c.bf16 %v1576, %v1576
          %s1609 = ssub.s32 1, %s355
          %s1610 = sshra.s32 %s1544, 3
          %s1611 = sand.u32 %s1544, 7
          %s1612 = smul.u32 %s1609, 32
          %s1613 = sadd.s32 %s1610, %s1612
          %s1614 = smul.addr %s1613, 4
          %s1615 = scalar_lea.vmem [#allocation2], %s1614
          %1616 = vst [vmem:[%s1615] sm:$0xf] %v1577
          %1617 = vst [vmem:[%s1615 + $0x4] sm:$0xf] %v1578
          %1618 = vst [vmem:[%s1615 + $0x8] sm:$0xf] %v1579
          %1619 = vst [vmem:[%s1615 + $0xc] sm:$0xf] %v1580
          %1620 = vst [vmem:[%s1615 + $0x10] sm:$0xf] %v1581
          %1621 = vst [vmem:[%s1615 + $0x14] sm:$0xf] %v1582
          %1622 = vst [vmem:[%s1615 + $0x18] sm:$0xf] %v1583
          %1623 = vst [vmem:[%s1615 + $0x1c] sm:$0xf] %v1584
          %1624 = vst [vmem:[%s1615 + $0x20] sm:$0xf] %v1585
          %1625 = vst [vmem:[%s1615 + $0x24] sm:$0xf] %v1586
          %1626 = vst [vmem:[%s1615 + $0x28] sm:$0xf] %v1587
          %1627 = vst [vmem:[%s1615 + $0x2c] sm:$0xf] %v1588
          %1628 = vst [vmem:[%s1615 + $0x30] sm:$0xf] %v1589
          %1629 = vst [vmem:[%s1615 + $0x34] sm:$0xf] %v1590
          %1630 = vst [vmem:[%s1615 + $0x38] sm:$0xf] %v1591
          %1631 = vst [vmem:[%s1615 + $0x3c] sm:$0xf] %v1592
          %1632 = vst [vmem:[%s1615 + $0x40] sm:$0xf] %v1593
          %1633 = vst [vmem:[%s1615 + $0x44] sm:$0xf] %v1594
          %1634 = vst [vmem:[%s1615 + $0x48] sm:$0xf] %v1595
          %1635 = vst [vmem:[%s1615 + $0x4c] sm:$0xf] %v1596
          %1636 = vst [vmem:[%s1615 + $0x50] sm:$0xf] %v1597
          %1637 = vst [vmem:[%s1615 + $0x54] sm:$0xf] %v1598
          %1638 = vst [vmem:[%s1615 + $0x58] sm:$0xf] %v1599
          %1639 = vst [vmem:[%s1615 + $0x5c] sm:$0xf] %v1600
          %1640 = vst [vmem:[%s1615 + $0x60] sm:$0xf] %v1601
          %1641 = vst [vmem:[%s1615 + $0x64] sm:$0xf] %v1602
          %1642 = vst [vmem:[%s1615 + $0x68] sm:$0xf] %v1603
          %1643 = vst [vmem:[%s1615 + $0x6c] sm:$0xf] %v1604
          %1644 = vst [vmem:[%s1615 + $0x70] sm:$0xf] %v1605
          %1645 = vst [vmem:[%s1615 + $0x74] sm:$0xf] %v1606
          %1646 = vst [vmem:[%s1615 + $0x78] sm:$0xf] %v1607
          %1647 = vst [vmem:[%s1615 + $0x7c] sm:$0xf] %v1608
        $region92: #{gcn_forward_fused.1} parent=87 // pred_fallthru
          _
      $region88: #{gcn_forward_fused.1} parent=31 // pred_fallthru
        _
      %s1648 = smul.u32 32, %s22
      %p1649 = scmp.lt.s32.totalorder %s1648, 31
      %s1650 = scalar_select %p1649, %s1648, 31
      %s1651 = smul.addr %s1650, 4
      %s1652 = scalar_lea.vmem %s5, %s1651
      // Predicated region
      $region93: #{gcn_forward_fused.1} parent=31 // pred_check
        %p1653 = pneg %p131
      $region94: #{gcn_forward_fused.1} parent=31 // pred_check_branch
        %1655 = sbr.rel (%p1653) target = $region96
      $region95: #{gcn_forward_fused.1} parent=31 // pred_region
        %s1656 = smul.u32 32, %s22
      $region96: #{gcn_forward_fused.1} parent=31 // pred_fallthru
        _
      // Predicated region
      $region97: #{gcn_forward_fused.1} parent=31 // pred_check
        %p1657 = pneg %p131
      $region98: #{gcn_forward_fused.1} parent=31 // pred_check_branch
        %1659 = sbr.rel (%p1657) target = $region100
      $region99: #{gcn_forward_fused.1} parent=31 // pred_region
        %s1660 = smul.u32 32, %s22
        %p1661 = scmp.lt.s32.totalorder %s1660, 31
        %s1662 = scalar_select %p1661, %s1660, 31
        %s1663 = smul.addr %s1662, 4
        %s1664 = scalar_lea.vmem %s5, %s1663
      $region100: #{gcn_forward_fused.1} parent=31 // pred_fallthru
        _
    $region32: #{gcn_forward_fused.1} parent=5 // pred_fallthru
      _
    %p1665 = scmp.le.s32.totalorder 2, %s11
    // Predicated region
    $region101: #{gcn_forward_fused.1} parent=5 // pred_check
      %p1666 = pneg %p1665
    $region102: #{gcn_forward_fused.1} parent=5 // pred_check_branch
      %1668 = sbr.rel (%p1666) target = $region104
    $region103: #{gcn_forward_fused.1} parent=5 // pred_region
      %s1669 = ssub.s32 %s11, 2
    $region104: #{gcn_forward_fused.1} parent=5 // pred_fallthru
      _
  $region6: #{gcn_forward_fused.1} parent=0 // loop_footer
    %s15 = sadd.s32 1, %s11
  $region7: #{gcn_forward_fused.1} parent=0 // loop_footer_branch
    %10 = sbr.rel target = $region3
  $region8: #{gcn_forward_fused.1} parent=0 // loop_exit
    _

</llo_original>
